<compile_context>
chip_gen: v6e
topology: v6e:2x2x1
jax: 0.10.0
libtpu: 0.0.40
codegen_flags: <defaults>
</compile_context>

<pallas_src>
import jax
import jax.numpy as jnp
import numpy as np
from jax.experimental import pallas as pl
from jax.experimental.pallas import tpu as pltpu

INPUT_DIM = 784
PADDED_INPUT_DIM = 896            # 7 * 128, zero-padded
HIDDEN_DIMS = [512, 256, 128]
OUTPUT_DIM = 10
PADDED_OUTPUT_DIM = 128           # lane-dense final layer, sliced to 10 in wrapper
EPS = 1e-5

TILE_M = 256                      # batch tile for the tiled path (MXU-row sized)
_VMEM_LIMIT = 32 << 20            # leaves headroom on v7x (64 MiB physical VMEM)


# ----------------------------------------------------------------------------
# Monolithic fused kernel (small batch): whole forward in one pallas_call.
# ----------------------------------------------------------------------------
def _mono_kernel(x_ref, w1_ref, w2_ref, w3_ref, w4_ref, vec_ref, o_ref):
    def block(h, w_ref, row, dout):
        b = vec_ref[row:row + 1, :dout]
        g = vec_ref[row + 1:row + 2, :dout]
        be = vec_ref[row + 2:row + 3, :dout]
        z = jnp.dot(h.astype(jnp.bfloat16), w_ref[...],
                    preferred_element_type=jnp.float32) + b
        a = jnp.maximum(z, 0.0)
        inv_n = 1.0 / a.shape[0]
        s = jnp.sum(a, axis=0, keepdims=True)
        sq = jnp.sum(a * a, axis=0, keepdims=True)
        mean = s * inv_n
        var = jnp.maximum(sq * inv_n - mean * mean, 0.0)
        scale = g * jax.lax.rsqrt(var + EPS)
        shift = be - mean * scale
        return a * scale + shift

    h = x_ref[...]
    h = block(h, w1_ref, 0, HIDDEN_DIMS[0])
    h = block(h, w2_ref, 3, HIDDEN_DIMS[1])
    h = block(h, w3_ref, 6, HIDDEN_DIMS[2])
    b4 = vec_ref[9:10, :PADDED_OUTPUT_DIM]
    o_ref[...] = jnp.dot(h.astype(jnp.bfloat16), w4_ref[...],
                         preferred_element_type=jnp.float32) + b4


def _mono_forward(xp, params):
    batch = xp.shape[0]
    vmem = pl.BlockSpec(memory_space=pltpu.MemorySpace.VMEM)
    return pl.pallas_call(
        _mono_kernel,
        out_shape=jax.ShapeDtypeStruct((batch, PADDED_OUTPUT_DIM), jnp.float32),
        in_specs=[vmem] * 6,
        out_specs=vmem,
        compiler_params=pltpu.CompilerParams(vmem_limit_bytes=_VMEM_LIMIT),
    )(xp, params["w1"], params["w2"], params["w3"], params["w4"], params["vec"])


# ----------------------------------------------------------------------------
# Batch-tiled path (large batch): one pallas_call per layer, grid over batch
# tiles, weights resident, exact full-batch BN via partial-sum reduction.
# ----------------------------------------------------------------------------
def _tiled_hidden_kernel(ss_ref, b_ref, x_ref, w_ref, a_ref, stats_ref):
    # BN-apply of previous layer (scale/shift precomputed; identity for layer 1),
    # then Linear + ReLU of this layer, plus per-tile sum / sum-of-squares.
    h = x_ref[...] * ss_ref[0:1, :] + ss_ref[1:2, :]
    z = jnp.dot(h.astype(jnp.bfloat16), w_ref[...],
                preferred_element_type=jnp.float32) + b_ref[...]
    a = jnp.maximum(z, 0.0)
    a_ref[...] = a
    s = jnp.sum(a, axis=0, keepdims=True)
    sq = jnp.sum(a * a, axis=0, keepdims=True)
    stats_ref[...] = jnp.concatenate([s, sq], axis=0)


def _tiled_final_kernel(ss_ref, b_ref, x_ref, w_ref, o_ref):
    h = x_ref[...] * ss_ref[0:1, :] + ss_ref[1:2, :]
    o_ref[...] = jnp.dot(h.astype(jnp.bfloat16), w_ref[...],
                         preferred_element_type=jnp.float32) + b_ref[...]


def _tiled_hidden_layer(x, ss, b, w, tile_m):
    batch, din = x.shape
    dout = w.shape[1]
    nt = batch // tile_m
    a, stats = pl.pallas_call(
        _tiled_hidden_kernel,
        out_shape=(jax.ShapeDtypeStruct((batch, dout), jnp.float32),
                   jax.ShapeDtypeStruct((nt, 2, dout), jnp.float32)),
        grid=(nt,),
        in_specs=[
            pl.BlockSpec((2, din), lambda i: (0, 0)),        # scale/shift (resident)
            pl.BlockSpec((1, dout), lambda i: (0, 0)),       # bias (resident)
            pl.BlockSpec((tile_m, din), lambda i: (i, 0)),   # activation tile
            pl.BlockSpec((din, dout), lambda i: (0, 0)),     # weight (resident)
        ],
        out_specs=(pl.BlockSpec((tile_m, dout), lambda i: (i, 0)),
                   pl.BlockSpec((None, 2, dout), lambda i: (i, 0, 0))),
        compiler_params=pltpu.CompilerParams(
            dimension_semantics=("parallel",),               # megacore on v7x
            vmem_limit_bytes=_VMEM_LIMIT),
    )(ss, b, x, w)
    return a, stats


def _bn_scale_shift(stats, g, be, batch):
    # Reduce per-tile partial sums -> exact full-batch BN scale/shift (tiny XLA op).
    s = jnp.sum(stats[:, 0, :], axis=0, keepdims=True)
    sq = jnp.sum(stats[:, 1, :], axis=0, keepdims=True)
    mean = s / batch
    var = jnp.maximum(sq / batch - mean * mean, 0.0)
    scale = g * jax.lax.rsqrt(var + EPS)
    shift = be - mean * scale
    return jnp.concatenate([scale, shift], axis=0)           # (2, dout)


def _tiled_forward(xp, params, tile_m):
    batch = xp.shape[0]
    d1, d2, d3 = HIDDEN_DIMS
    vec = params["vec"]
    b1, g1, be1 = vec[0:1, :d1], vec[1:2, :d1], vec[2:3, :d1]
    b2, g2, be2 = vec[3:4, :d2], vec[4:5, :d2], vec[5:6, :d2]
    b3, g3, be3 = vec[6:7, :d3], vec[7:8, :d3], vec[8:9, :d3]
    b4 = vec[9:10, :PADDED_OUTPUT_DIM]

    # Layer 1 uses an identity "BN" prologue (scale=1, shift=0).
    ss0 = jnp.concatenate([jnp.ones((1, PADDED_INPUT_DIM), jnp.float32),
                           jnp.zeros((1, PADDED_INPUT_DIM), jnp.float32)], axis=0)
    a1, st1 = _tiled_hidden_layer(xp, ss0, b1, params["w1"], tile_m)
    ss1 = _bn_scale_shift(st1, g1, be1, batch)
    a2, st2 = _tiled_hidden_layer(a1, ss1, b2, params["w2"], tile_m)
    ss2 = _bn_scale_shift(st2, g2, be2, batch)
    a3, st3 = _tiled_hidden_layer(a2, ss2, b3, params["w3"], tile_m)
    ss3 = _bn_scale_shift(st3, g3, be3, batch)

    nt = batch // tile_m
    out = pl.pallas_call(
        _tiled_final_kernel,
        out_shape=jax.ShapeDtypeStruct((batch, PADDED_OUTPUT_DIM), jnp.float32),
        grid=(nt,),
        in_specs=[
            pl.BlockSpec((2, d3), lambda i: (0, 0)),
            pl.BlockSpec((1, PADDED_OUTPUT_DIM), lambda i: (0, 0)),
            pl.BlockSpec((tile_m, d3), lambda i: (i, 0)),
            pl.BlockSpec((d3, PADDED_OUTPUT_DIM), lambda i: (0, 0)),
        ],
        out_specs=pl.BlockSpec((tile_m, PADDED_OUTPUT_DIM), lambda i: (i, 0)),
        compiler_params=pltpu.CompilerParams(
            dimension_semantics=("parallel",),
            vmem_limit_bytes=_VMEM_LIMIT),
    )(ss3, b4, a3, params["w4"])
    return out


# ----------------------------------------------------------------------------
# Public forward + params + reference
# ----------------------------------------------------------------------------
@jax.jit
def mlp_forward(x, params):
    """x: (B, 784) f32 -> (B, 10) f32."""
    batch = x.shape[0]
    xp = jnp.pad(x, ((0, 0), (0, PADDED_INPUT_DIM - INPUT_DIM)))
    if batch % TILE_M == 0 and batch >= 2 * TILE_M:
        out = _tiled_forward(xp, params, TILE_M)
    else:
        # TODO(synk): ragged large batches (not a multiple of TILE_M) would need
        # row masking in the BN partial-sum kernels; they fall back to the fused path.
        out = _mono_forward(xp, params)
    return out[:, :OUTPUT_DIM]


def init_params(key):
    """Deterministic params mirroring nn.Linear default init; BN gamma=1, beta=0.

    Weights stored transposed as (in_dim, out_dim) in bf16, zero-padded:
      w1: (896, 512)   w2: (512, 256)   w3: (256, 128)   w4: (128, 128)
    Per-channel vectors packed into one f32 array `vec` of shape (10, 512):
      rows 0..2: b1, g1, be1 | 3..5: b2, g2, be2 | 6..8: b3, g3, be3 | 9: b4 (padded).
    """
    dims = [INPUT_DIM] + HIDDEN_DIMS + [OUTPUT_DIM]
    vec_w = max(HIDDEN_DIMS)
    weights, vec_rows = [], []
    for li, (din, dout) in enumerate(zip(dims[:-1], dims[1:])):
        key, kw, kb = jax.random.split(key, 3)
        bound = 1.0 / np.sqrt(din)
        w = jax.random.uniform(kw, (din, dout), jnp.float32, -bound, bound)
        b = jax.random.uniform(kb, (1, dout), jnp.float32, -bound, bound)
        if li == 0:
            w = jnp.pad(w, ((0, PADDED_INPUT_DIM - INPUT_DIM), (0, 0)))
        if li == len(dims) - 2:   # final layer: lane-dense padding of output dim
            w = jnp.pad(w, ((0, 0), (0, PADDED_OUTPUT_DIM - OUTPUT_DIM)))
            b = jnp.pad(b, ((0, 0), (0, PADDED_OUTPUT_DIM - OUTPUT_DIM)))
        weights.append(w.astype(jnp.bfloat16))
        vec_rows.append(jnp.pad(b, ((0, 0), (0, vec_w - b.shape[1]))))
        if li < len(HIDDEN_DIMS):
            vec_rows.append(jnp.pad(jnp.ones((1, dout), jnp.float32),
                                    ((0, 0), (0, vec_w - dout))))
            vec_rows.append(jnp.pad(jnp.zeros((1, dout), jnp.float32),
                                    ((0, 0), (0, vec_w - dout))))
    vec = jnp.concatenate(vec_rows, axis=0)   # (10, 512)
    return {"w1": weights[0], "w2": weights[1], "w3": weights[2],
            "w4": weights[3], "vec": vec}


def mlp_reference(x, params):
    """Pure-JAX reference: (Linear -> ReLU -> BatchNorm1d[train]) x3 -> Linear,
    with the same mixed-precision policy as the kernels (bf16 matmul inputs,
    f32 accumulation, f32 BN statistics, biased variance, eps=1e-5)."""
    d1, d2, d3 = HIDDEN_DIMS
    vec = params["vec"]
    xp = jnp.pad(x, ((0, 0), (0, PADDED_INPUT_DIM - INPUT_DIM)))

    def dot(h, w):
        return jnp.dot(h.astype(jnp.bfloat16), w, preferred_element_type=jnp.float32)

    def block(h, w, b, g, be):
        a = jnp.maximum(dot(h, w) + b, 0.0)
        m = jnp.mean(a, axis=0, keepdims=True)
        v = jnp.mean((a - m) ** 2, axis=0, keepdims=True)
        return g * (a - m) * jax.lax.rsqrt(v + EPS) + be

    h = block(xp, params["w1"], vec[0:1, :d1], vec[1:2, :d1], vec[2:3, :d1])
    h = block(h, params["w2"], vec[3:4, :d2], vec[4:5, :d2], vec[5:6, :d2])
    h = block(h, params["w3"], vec[6:7, :d3], vec[7:8, :d3], vec[8:9, :d3])
    out = dot(h, params["w4"]) + vec[9:10, :PADDED_OUTPUT_DIM]
    return out[:, :OUTPUT_DIM]


if __name__ == "__main__":
    key = jax.random.PRNGKey(0)
    key, kx_small, kx_big = jax.random.split(key, 3)
    params = init_params(key)

    # Small batch -> fully fused single-call kernel.
    x_small = jax.random.normal(kx_small, (8, INPUT_DIM), jnp.float32)
    out_small = jax.block_until_ready(mlp_forward(x_small, params))
    ref_small = jax.block_until_ready(mlp_reference(x_small, params))
    assert out_small.shape == (8, OUTPUT_DIM), out_small.shape
    np.testing.assert_allclose(np.asarray(out_small), np.asarray(ref_small),
                               rtol=1e-2, atol=1e-2)

    # Larger batch -> batch-tiled path (grid over 256-row tiles, resident weights,
    # exact full-batch BN via partial-sum reduction).
    x_big = jax.random.normal(kx_big, (512, INPUT_DIM), jnp.float32)
    out_big = jax.block_until_ready(mlp_forward(x_big, params))
    ref_big = jax.block_until_ready(mlp_reference(x_big, params))
    assert out_big.shape == (512, OUTPUT_DIM), out_big.shape
    np.testing.assert_allclose(np.asarray(out_big), np.asarray(ref_big),
                               rtol=1e-2, atol=1e-2)

    print("KERNEL_OK")
</pallas_src>

<mosaic_0001>
module attributes {stable_mosaic.version = 11 : i64} {
  func.func @_mono_kernel(%arg0: memref<8x896xf32, #tpu.memory_space<vmem>>, %arg1: memref<896x512xbf16, #tpu.memory_space<vmem>>, %arg2: memref<512x256xbf16, #tpu.memory_space<vmem>>, %arg3: memref<256x128xbf16, #tpu.memory_space<vmem>>, %arg4: memref<128x128xbf16, #tpu.memory_space<vmem>>, %arg5: memref<10x512xf32, #tpu.memory_space<vmem>>, %arg6: memref<8x128xf32, #tpu.memory_space<vmem>>) attributes {dimension_semantics = [], scalar_prefetch = 0 : i64, scratch_operands = 0 : i64, tpu.core_type = #tpu.core_type<tc>} {
    %c0 = arith.constant 0 : index
    %c0_0 = arith.constant 0 : index
    %0 = vector.load %arg0[%c0, %c0_0] : memref<8x896xf32, #tpu.memory_space<vmem>>, vector<8x896xf32>
    %c0_1 = arith.constant 0 : index
    %c0_2 = arith.constant 0 : index
    %1 = vector.load %arg5[%c0_1, %c0_2] : memref<10x512xf32, #tpu.memory_space<vmem>>, vector<1x512xf32>
    %c1 = arith.constant 1 : index
    %c0_3 = arith.constant 0 : index
    %2 = vector.load %arg5[%c1, %c0_3] : memref<10x512xf32, #tpu.memory_space<vmem>>, vector<1x512xf32>
    %c2 = arith.constant 2 : index
    %c0_4 = arith.constant 0 : index
    %3 = vector.load %arg5[%c2, %c0_4] : memref<10x512xf32, #tpu.memory_space<vmem>>, vector<1x512xf32>
    %4 = arith.truncf %0 : vector<8x896xf32> to vector<8x896xbf16>
    %c0_5 = arith.constant 0 : index
    %c0_6 = arith.constant 0 : index
    %5 = vector.load %arg1[%c0_5, %c0_6] : memref<896x512xbf16, #tpu.memory_space<vmem>>, vector<896x512xbf16>
    %cst = arith.constant dense<0.000000e+00> : vector<8x512xf32>
    %6 = tpu.matmul %4, %5, %cst {dimension_numbers = #tpu.dot_dimension_numbers<[1], [0], [0], [1], [0, 0, 1, 1], [], []>} : vector<8x896xbf16>, vector<896x512xbf16>, vector<8x512xf32> -> vector<8x512xf32>
    %7 = vector.broadcast %1 : vector<1x512xf32> to vector<8x512xf32>
    %8 = arith.addf %6, %7 : vector<8x512xf32>
    %cst_7 = arith.constant 0.000000e+00 : f32
    %9 = vector.broadcast %cst_7 : f32 to vector<8x512xf32>
    %10 = arith.maximumf %8, %9 : vector<8x512xf32>
    %cst_8 = arith.constant dense<0.000000e+00> : vector<512xf32>
    %11 = vector.multi_reduction <add>, %10, %cst_8 [0] : vector<8x512xf32> to vector<512xf32>
    %12 = vector.shape_cast %11 : vector<512xf32> to vector<1x512xf32>
    %13 = arith.mulf %10, %10 : vector<8x512xf32>
    %cst_9 = arith.constant dense<0.000000e+00> : vector<512xf32>
    %14 = vector.multi_reduction <add>, %13, %cst_9 [0] : vector<8x512xf32> to vector<512xf32>
    %15 = vector.shape_cast %14 : vector<512xf32> to vector<1x512xf32>
    %cst_10 = arith.constant 1.250000e-01 : f32
    %16 = vector.broadcast %cst_10 : f32 to vector<1x512xf32>
    %17 = arith.mulf %12, %16 : vector<1x512xf32>
    %cst_11 = arith.constant 1.250000e-01 : f32
    %18 = vector.broadcast %cst_11 : f32 to vector<1x512xf32>
    %19 = arith.mulf %15, %18 : vector<1x512xf32>
    %20 = arith.mulf %17, %17 : vector<1x512xf32>
    %21 = arith.subf %19, %20 : vector<1x512xf32>
    %cst_12 = arith.constant 0.000000e+00 : f32
    %22 = vector.broadcast %cst_12 : f32 to vector<1x512xf32>
    %23 = arith.maximumf %21, %22 : vector<1x512xf32>
    %cst_13 = arith.constant 9.99999974E-6 : f32
    %24 = vector.broadcast %cst_13 : f32 to vector<1x512xf32>
    %25 = arith.addf %23, %24 : vector<1x512xf32>
    %26 = math.rsqrt %25 : vector<1x512xf32>
    %27 = arith.mulf %2, %26 : vector<1x512xf32>
    %28 = arith.mulf %17, %27 : vector<1x512xf32>
    %29 = arith.subf %3, %28 : vector<1x512xf32>
    %30 = vector.broadcast %27 : vector<1x512xf32> to vector<8x512xf32>
    %31 = arith.mulf %10, %30 : vector<8x512xf32>
    %32 = vector.broadcast %29 : vector<1x512xf32> to vector<8x512xf32>
    %33 = arith.addf %31, %32 : vector<8x512xf32>
    %c3 = arith.constant 3 : index
    %c0_14 = arith.constant 0 : index
    %34 = vector.load %arg5[%c3, %c0_14] : memref<10x512xf32, #tpu.memory_space<vmem>>, vector<1x256xf32>
    %c4 = arith.constant 4 : index
    %c0_15 = arith.constant 0 : index
    %35 = vector.load %arg5[%c4, %c0_15] : memref<10x512xf32, #tpu.memory_space<vmem>>, vector<1x256xf32>
    %c5 = arith.constant 5 : index
    %c0_16 = arith.constant 0 : index
    %36 = vector.load %arg5[%c5, %c0_16] : memref<10x512xf32, #tpu.memory_space<vmem>>, vector<1x256xf32>
    %37 = arith.truncf %33 : vector<8x512xf32> to vector<8x512xbf16>
    %c0_17 = arith.constant 0 : index
    %c0_18 = arith.constant 0 : index
    %38 = vector.load %arg2[%c0_17, %c0_18] : memref<512x256xbf16, #tpu.memory_space<vmem>>, vector<512x256xbf16>
    %cst_19 = arith.constant dense<0.000000e+00> : vector<8x256xf32>
    %39 = tpu.matmul %37, %38, %cst_19 {dimension_numbers = #tpu.dot_dimension_numbers<[1], [0], [0], [1], [0, 0, 1, 1], [], []>} : vector<8x512xbf16>, vector<512x256xbf16>, vector<8x256xf32> -> vector<8x256xf32>
    %40 = vector.broadcast %34 : vector<1x256xf32> to vector<8x256xf32>
    %41 = arith.addf %39, %40 : vector<8x256xf32>
    %cst_20 = arith.constant 0.000000e+00 : f32
    %42 = vector.broadcast %cst_20 : f32 to vector<8x256xf32>
    %43 = arith.maximumf %41, %42 : vector<8x256xf32>
    %cst_21 = arith.constant dense<0.000000e+00> : vector<256xf32>
    %44 = vector.multi_reduction <add>, %43, %cst_21 [0] : vector<8x256xf32> to vector<256xf32>
    %45 = vector.shape_cast %44 : vector<256xf32> to vector<1x256xf32>
    %46 = arith.mulf %43, %43 : vector<8x256xf32>
    %cst_22 = arith.constant dense<0.000000e+00> : vector<256xf32>
    %47 = vector.multi_reduction <add>, %46, %cst_22 [0] : vector<8x256xf32> to vector<256xf32>
    %48 = vector.shape_cast %47 : vector<256xf32> to vector<1x256xf32>
    %cst_23 = arith.constant 1.250000e-01 : f32
    %49 = vector.broadcast %cst_23 : f32 to vector<1x256xf32>
    %50 = arith.mulf %45, %49 : vector<1x256xf32>
    %cst_24 = arith.constant 1.250000e-01 : f32
    %51 = vector.broadcast %cst_24 : f32 to vector<1x256xf32>
    %52 = arith.mulf %48, %51 : vector<1x256xf32>
    %53 = arith.mulf %50, %50 : vector<1x256xf32>
    %54 = arith.subf %52, %53 : vector<1x256xf32>
    %cst_25 = arith.constant 0.000000e+00 : f32
    %55 = vector.broadcast %cst_25 : f32 to vector<1x256xf32>
    %56 = arith.maximumf %54, %55 : vector<1x256xf32>
    %cst_26 = arith.constant 9.99999974E-6 : f32
    %57 = vector.broadcast %cst_26 : f32 to vector<1x256xf32>
    %58 = arith.addf %56, %57 : vector<1x256xf32>
    %59 = math.rsqrt %58 : vector<1x256xf32>
    %60 = arith.mulf %35, %59 : vector<1x256xf32>
    %61 = arith.mulf %50, %60 : vector<1x256xf32>
    %62 = arith.subf %36, %61 : vector<1x256xf32>
    %63 = vector.broadcast %60 : vector<1x256xf32> to vector<8x256xf32>
    %64 = arith.mulf %43, %63 : vector<8x256xf32>
    %65 = vector.broadcast %62 : vector<1x256xf32> to vector<8x256xf32>
    %66 = arith.addf %64, %65 : vector<8x256xf32>
    %c6 = arith.constant 6 : index
    %c0_27 = arith.constant 0 : index
    %67 = vector.load %arg5[%c6, %c0_27] : memref<10x512xf32, #tpu.memory_space<vmem>>, vector<1x128xf32>
    %c7 = arith.constant 7 : index
    %c0_28 = arith.constant 0 : index
    %68 = vector.load %arg5[%c7, %c0_28] : memref<10x512xf32, #tpu.memory_space<vmem>>, vector<1x128xf32>
    %c8 = arith.constant 8 : index
    %c0_29 = arith.constant 0 : index
    %69 = vector.load %arg5[%c8, %c0_29] : memref<10x512xf32, #tpu.memory_space<vmem>>, vector<1x128xf32>
    %70 = arith.truncf %66 : vector<8x256xf32> to vector<8x256xbf16>
    %c0_30 = arith.constant 0 : index
    %c0_31 = arith.constant 0 : index
    %71 = vector.load %arg3[%c0_30, %c0_31] : memref<256x128xbf16, #tpu.memory_space<vmem>>, vector<256x128xbf16>
    %cst_32 = arith.constant dense<0.000000e+00> : vector<8x128xf32>
    %72 = tpu.matmul %70, %71, %cst_32 {dimension_numbers = #tpu.dot_dimension_numbers<[1], [0], [0], [1], [0, 0, 1, 1], [], []>} : vector<8x256xbf16>, vector<256x128xbf16>, vector<8x128xf32> -> vector<8x128xf32>
    %73 = vector.broadcast %67 : vector<1x128xf32> to vector<8x128xf32>
    %74 = arith.addf %72, %73 : vector<8x128xf32>
    %cst_33 = arith.constant 0.000000e+00 : f32
    %75 = vector.broadcast %cst_33 : f32 to vector<8x128xf32>
    %76 = arith.maximumf %74, %75 : vector<8x128xf32>
    %cst_34 = arith.constant dense<0.000000e+00> : vector<128xf32>
    %77 = vector.multi_reduction <add>, %76, %cst_34 [0] : vector<8x128xf32> to vector<128xf32>
    %78 = vector.shape_cast %77 : vector<128xf32> to vector<1x128xf32>
    %79 = arith.mulf %76, %76 : vector<8x128xf32>
    %cst_35 = arith.constant dense<0.000000e+00> : vector<128xf32>
    %80 = vector.multi_reduction <add>, %79, %cst_35 [0] : vector<8x128xf32> to vector<128xf32>
    %81 = vector.shape_cast %80 : vector<128xf32> to vector<1x128xf32>
    %cst_36 = arith.constant 1.250000e-01 : f32
    %82 = vector.broadcast %cst_36 : f32 to vector<1x128xf32>
    %83 = arith.mulf %78, %82 : vector<1x128xf32>
    %cst_37 = arith.constant 1.250000e-01 : f32
    %84 = vector.broadcast %cst_37 : f32 to vector<1x128xf32>
    %85 = arith.mulf %81, %84 : vector<1x128xf32>
    %86 = arith.mulf %83, %83 : vector<1x128xf32>
    %87 = arith.subf %85, %86 : vector<1x128xf32>
    %cst_38 = arith.constant 0.000000e+00 : f32
    %88 = vector.broadcast %cst_38 : f32 to vector<1x128xf32>
    %89 = arith.maximumf %87, %88 : vector<1x128xf32>
    %cst_39 = arith.constant 9.99999974E-6 : f32
    %90 = vector.broadcast %cst_39 : f32 to vector<1x128xf32>
    %91 = arith.addf %89, %90 : vector<1x128xf32>
    %92 = math.rsqrt %91 : vector<1x128xf32>
    %93 = arith.mulf %68, %92 : vector<1x128xf32>
    %94 = arith.mulf %83, %93 : vector<1x128xf32>
    %95 = arith.subf %69, %94 : vector<1x128xf32>
    %96 = vector.broadcast %93 : vector<1x128xf32> to vector<8x128xf32>
    %97 = arith.mulf %76, %96 : vector<8x128xf32>
    %98 = vector.broadcast %95 : vector<1x128xf32> to vector<8x128xf32>
    %99 = arith.addf %97, %98 : vector<8x128xf32>
    %c9 = arith.constant 9 : index
    %c0_40 = arith.constant 0 : index
    %100 = vector.load %arg5[%c9, %c0_40] : memref<10x512xf32, #tpu.memory_space<vmem>>, vector<1x128xf32>
    %101 = arith.truncf %99 : vector<8x128xf32> to vector<8x128xbf16>
    %c0_41 = arith.constant 0 : index
    %c0_42 = arith.constant 0 : index
    %102 = vector.load %arg4[%c0_41, %c0_42] : memref<128x128xbf16, #tpu.memory_space<vmem>>, vector<128x128xbf16>
    %cst_43 = arith.constant dense<0.000000e+00> : vector<8x128xf32>
    %103 = tpu.matmul %101, %102, %cst_43 {dimension_numbers = #tpu.dot_dimension_numbers<[1], [0], [0], [1], [0, 0, 1, 1], [], []>} : vector<8x128xbf16>, vector<128x128xbf16>, vector<8x128xf32> -> vector<8x128xf32>
    %104 = vector.broadcast %100 : vector<1x128xf32> to vector<8x128xf32>
    %105 = arith.addf %103, %104 : vector<8x128xf32>
    %c0_44 = arith.constant 0 : index
    %c0_45 = arith.constant 0 : index
    %106 = vector.load %arg6[%c0_44, %c0_45] : memref<8x128xf32, #tpu.memory_space<vmem>>, vector<8x128xf32>
    tpu.vector_store %arg6[%c0_44, %c0_45], %105 {strides = array<i32>} : memref<8x128xf32, #tpu.memory_space<vmem>>, vector<8x128xf32>,
    return
  }
}

</mosaic_0001>

<llo_original>
// kernel: mlp_forward.1
$region0: #{mlp_forward.1}
  #allocation0 [shape = 'u32[]', space=smem, size = 0x4, offset = 0x4, fixed_abs, tag = 'smem constant byte address 0x4 - core index']
  #allocation1 [shape = 'u32[144,128]{1,0:T(1,128)}', space=vmem, size = 0x12000, scoped, tag = 'internal scratch']
  %s0 = inlined_call_operand.vmem [shape: f32[8,896], index: 0, kind: input, shape index: {}]
  %s1 = inlined_call_operand.hbm [shape: bf16[896,512], index: 1, kind: input, shape index: {}]
  %s2 = inlined_call_operand.hbm [shape: bf16[512,256], index: 2, kind: input, shape index: {}]
  %s3 = inlined_call_operand.hbm [shape: bf16[256,128], index: 3, kind: input, shape index: {}]
  %s4 = inlined_call_operand.vmem [shape: bf16[128,128], index: 4, kind: input, shape index: {}]
  %s5 = inlined_call_operand.hbm [shape: f32[10,512], index: 5, kind: input, shape index: {}]
  %s6 = inlined_call_operand.hbm [shape: f32[8,128], index: 6, kind: output, shape index: {}]
  %s7 = sld [smem:[#allocation0]]
  $region50: #{mlp_forward.1} parent=0
    _
  %s9 = ssub.s32 1, %s7
  %s10 = scalar_select 0, %s9, %s7
  $region1: #{mlp_forward.1} parent=0
    #allocation2 [shape = 'u8[917504]{0}', space=vmem, size = 0xe0000, scoped, tag = 'input window, operand 1, single buffered']
    #allocation3 [shape = 's32[1]{0}', space=sflag, size = 0x4, scoped, tag = 'scoped memory for mlp_forward.1']
    #allocation4 [shape = 's32[1]{0}', space=sflag, size = 0x4, scoped, tag = 'scoped memory for mlp_forward.1']
    #allocation5 [shape = 'u8[262144]{0}', space=vmem, size = 0x40000, scoped, tag = 'input window, operand 2, single buffered']
    #allocation6 [shape = 's32[1]{0}', space=sflag, size = 0x4, scoped, tag = 'scoped memory for mlp_forward.1']
    #allocation7 [shape = 'u8[65536]{0}', space=vmem, size = 0x10000, scoped, tag = 'input window, operand 3, single buffered']
    #allocation8 [shape = 'u8[32768]{0}', space=vmem, size = 0x8000, scoped, tag = 'input window, operand 5, single buffered']
    #allocation9 [shape = 's32[1]{0}', space=sflag, size = 0x4, scoped, tag = 'scoped memory for mlp_forward.1']
    #allocation10 [shape = 'u8[4096]{0}', space=vmem, size = 0x1000, scoped, tag = 'output window, operand 0, single buffered']
    %11 = vsyncpa [#allocation3], 0
    %12 = vsyncpa [#allocation6], 0
    %13 = vsyncpa [#allocation9], 0
    %14 = vsyncpa [#allocation4], 0
    // Predicated region
    $region2: #{mlp_forward.1} parent=1 // pred_check
      _
    $region3: #{mlp_forward.1} parent=1 // pred_check_branch
      %16 = sbr.rel (0) target = $region5
    $region4: #{mlp_forward.1} parent=1 // pred_region
      _
    $region5: #{mlp_forward.1} parent=1 // pred_fallthru
      _
    // Predicated region
    $region6: #{mlp_forward.1} parent=1 // pred_check
      _
    $region7: #{mlp_forward.1} parent=1 // pred_check_branch
      %18 = sbr.rel (0) target = $region9
    $region8: #{mlp_forward.1} parent=1 // pred_region
      %s20 = ssub.s32 28672, 28672
      %21 = vsyncadd [#allocation3], %s20
      %s22 = sshll.u32 [#allocation2], 4
      %s23 = int_to_ptr.vmem [resolvable:$true] %s22
      %28 = dma.hbm_to_vmem [thread:$0]  %s1, 28672, %s23, [#allocation3], 256, 256, 16
    $region9: #{mlp_forward.1} parent=1 // pred_fallthru
      _
    // Predicated region
    $region10: #{mlp_forward.1} parent=1 // pred_check
      _
    $region11: #{mlp_forward.1} parent=1 // pred_check_branch
      %30 = sbr.rel (0) target = $region13
    $region12: #{mlp_forward.1} parent=1 // pred_region
      %s32 = ssub.s32 8192, 8192
      %33 = vsyncadd [#allocation6], %s32
      %s34 = sshll.u32 [#allocation5], 4
      %s35 = int_to_ptr.vmem [resolvable:$true] %s34
      %40 = dma.hbm_to_vmem [thread:$0]  %s2, 8192, %s35, [#allocation6], 128, 128, 8
    $region13: #{mlp_forward.1} parent=1 // pred_fallthru
      _
    // Predicated region
    $region14: #{mlp_forward.1} parent=1 // pred_check
      _
    $region15: #{mlp_forward.1} parent=1 // pred_check_branch
      %42 = sbr.rel (0) target = $region17
    $region16: #{mlp_forward.1} parent=1 // pred_region
      %s44 = ssub.s32 2048, 2048
      %45 = vsyncadd [#allocation6], %s44
      %s46 = sshll.u32 [#allocation7], 4
      %s47 = int_to_ptr.vmem [resolvable:$true] %s46
      %52 = dma.hbm_to_vmem [thread:$0]  %s3, 2048, %s47, [#allocation6], 64, 64, 4
    $region17: #{mlp_forward.1} parent=1 // pred_fallthru
      _
    // Predicated region
    $region18: #{mlp_forward.1} parent=1 // pred_check
      _
    $region19: #{mlp_forward.1} parent=1 // pred_check_branch
      %54 = sbr.rel (0) target = $region21
    $region20: #{mlp_forward.1} parent=1 // pred_region
      _
    $region21: #{mlp_forward.1} parent=1 // pred_fallthru
      _
    // Predicated region
    $region22: #{mlp_forward.1} parent=1 // pred_check
      _
    $region23: #{mlp_forward.1} parent=1 // pred_check_branch
      %56 = sbr.rel (0) target = $region25
    $region24: #{mlp_forward.1} parent=1 // pred_region
      %s58 = ssub.s32 1024, 1024
      %59 = vsyncadd [#allocation9], %s58
      %s60 = sshll.u32 [#allocation8], 4
      %s61 = int_to_ptr.vmem [resolvable:$true] %s60
      %66 = dma.hbm_to_vmem [thread:$0]  %s5, 1024, %s61, [#allocation9], 512, 512, 32
    $region25: #{mlp_forward.1} parent=1 // pred_fallthru
      _
    // Predicated region
    $region26: #{mlp_forward.1} parent=1 // pred_check
      _
    $region27: #{mlp_forward.1} parent=1 // pred_check_branch
      %68 = sbr.rel (0) target = $region29
    $region28: #{mlp_forward.1} parent=1 // pred_region
      %69 = dma.done [#allocation3], 28672
    $region29: #{mlp_forward.1} parent=1 // pred_fallthru
      _
    // Predicated region
    $region30: #{mlp_forward.1} parent=1 // pred_check
      _
    $region31: #{mlp_forward.1} parent=1 // pred_check_branch
      %71 = sbr.rel (0) target = $region33
    $region32: #{mlp_forward.1} parent=1 // pred_region
      %72 = dma.done [#allocation6], 8192
    $region33: #{mlp_forward.1} parent=1 // pred_fallthru
      _
    // Predicated region
    $region34: #{mlp_forward.1} parent=1 // pred_check
      _
    $region35: #{mlp_forward.1} parent=1 // pred_check_branch
      %74 = sbr.rel (0) target = $region37
    $region36: #{mlp_forward.1} parent=1 // pred_region
      %75 = dma.done [#allocation6], 2048
    $region37: #{mlp_forward.1} parent=1 // pred_fallthru
      _
    // Predicated region
    $region38: #{mlp_forward.1} parent=1 // pred_check
      _
    $region39: #{mlp_forward.1} parent=1 // pred_check_branch
      %77 = sbr.rel (0) target = $region41
    $region40: #{mlp_forward.1} parent=1 // pred_region
      %78 = dma.done [#allocation9], 1024
    $region41: #{mlp_forward.1} parent=1 // pred_fallthru
      _
    %v80 = vld [vmem:[%s0] sm:$0xff]
    %v81 = vld [vmem:[%s0 + $0x8] sm:$0xff]
    %v82 = vld [vmem:[%s0 + $0x10] sm:$0xff]
    %v83 = vld [vmem:[%s0 + $0x18] sm:$0xff]
    %v84 = vld [vmem:[%s0 + $0x20] sm:$0xff]
    %v85 = vld [vmem:[%s0 + $0x28] sm:$0xff]
    %v86 = vld [vmem:[%s0 + $0x30] sm:$0xff]
    %v87 = vld [vmem:[#allocation8] ss:$8 sm:$0xf]
    %s88 = scalar_lea.vmem [#allocation8], 1
    %v89 = vld [vmem:[%s88] ss:$8 sm:$0xf]
    %s90 = scalar_lea.vmem [#allocation8], 2
    %v91 = vld [vmem:[%s90] ss:$8 sm:$0xf]
    %v92 = vpack.c.bf16 %v80, %v80
    %v93 = vpack.c.bf16 %v81, %v81
    %v94 = vpack.c.bf16 %v82, %v82
    %v95 = vpack.c.bf16 %v83, %v83
    %v96 = vpack.c.bf16 %v84, %v84
    %v97 = vpack.c.bf16 %v85, %v85
    %v98 = vpack.c.bf16 %v86, %v86
    %v99 = vld [vmem:[#allocation2] sm:$0xff]
    %v100 = vld [vmem:[#allocation2 + $0x8] sm:$0xff]
    %v101 = vld [vmem:[#allocation2 + $0x10] sm:$0xff]
    %v102 = vld [vmem:[#allocation2 + $0x18] sm:$0xff]
    %v103 = vld [vmem:[#allocation2 + $0x20] sm:$0xff]
    %v104 = vld [vmem:[#allocation2 + $0x28] sm:$0xff]
    %v105 = vld [vmem:[#allocation2 + $0x30] sm:$0xff]
    %v106 = vld [vmem:[#allocation2 + $0x38] sm:$0xff]
    %v107 = vld [vmem:[#allocation2 + $0x40] sm:$0xff]
    %v108 = vld [vmem:[#allocation2 + $0x48] sm:$0xff]
    %v109 = vld [vmem:[#allocation2 + $0x50] sm:$0xff]
    %v110 = vld [vmem:[#allocation2 + $0x58] sm:$0xff]
    %v111 = vld [vmem:[#allocation2 + $0x60] sm:$0xff]
    %v112 = vld [vmem:[#allocation2 + $0x68] sm:$0xff]
    %v113 = vld [vmem:[#allocation2 + $0x70] sm:$0xff]
    %v114 = vld [vmem:[#allocation2 + $0x78] sm:$0xff]
    %v115 = vld [vmem:[#allocation2 + $0x80] sm:$0xff]
    %v116 = vld [vmem:[#allocation2 + $0x88] sm:$0xff]
    %v117 = vld [vmem:[#allocation2 + $0x90] sm:$0xff]
    %v118 = vld [vmem:[#allocation2 + $0x98] sm:$0xff]
    %v119 = vld [vmem:[#allocation2 + $0xa0] sm:$0xff]
    %v120 = vld [vmem:[#allocation2 + $0xa8] sm:$0xff]
    %v121 = vld [vmem:[#allocation2 + $0xb0] sm:$0xff]
    %v122 = vld [vmem:[#allocation2 + $0xb8] sm:$0xff]
    %v123 = vld [vmem:[#allocation2 + $0xc0] sm:$0xff]
    %v124 = vld [vmem:[#allocation2 + $0xc8] sm:$0xff]
    %v125 = vld [vmem:[#allocation2 + $0xd0] sm:$0xff]
    %v126 = vld [vmem:[#allocation2 + $0xd8] sm:$0xff]
    %v127 = vld [vmem:[#allocation2 + $0xe0] sm:$0xff]
    %v128 = vld [vmem:[#allocation2 + $0xe8] sm:$0xff]
    %v129 = vld [vmem:[#allocation2 + $0xf0] sm:$0xff]
    %v130 = vld [vmem:[#allocation2 + $0xf8] sm:$0xff]
    %v131 = vld [vmem:[#allocation2 + $0x100] sm:$0xff]
    %v132 = vld [vmem:[#allocation2 + $0x108] sm:$0xff]
    %v133 = vld [vmem:[#allocation2 + $0x110] sm:$0xff]
    %v134 = vld [vmem:[#allocation2 + $0x118] sm:$0xff]
    %v135 = vld [vmem:[#allocation2 + $0x120] sm:$0xff]
    %v136 = vld [vmem:[#allocation2 + $0x128] sm:$0xff]
    %v137 = vld [vmem:[#allocation2 + $0x130] sm:$0xff]
    %v138 = vld [vmem:[#allocation2 + $0x138] sm:$0xff]
    %v139 = vld [vmem:[#allocation2 + $0x140] sm:$0xff]
    %v140 = vld [vmem:[#allocation2 + $0x148] sm:$0xff]
    %v141 = vld [vmem:[#allocation2 + $0x150] sm:$0xff]
    %v142 = vld [vmem:[#allocation2 + $0x158] sm:$0xff]
    %v143 = vld [vmem:[#allocation2 + $0x160] sm:$0xff]
    %v144 = vld [vmem:[#allocation2 + $0x168] sm:$0xff]
    %v145 = vld [vmem:[#allocation2 + $0x170] sm:$0xff]
    %v146 = vld [vmem:[#allocation2 + $0x178] sm:$0xff]
    %v147 = vld [vmem:[#allocation2 + $0x180] sm:$0xff]
    %v148 = vld [vmem:[#allocation2 + $0x188] sm:$0xff]
    %v149 = vld [vmem:[#allocation2 + $0x190] sm:$0xff]
    %v150 = vld [vmem:[#allocation2 + $0x198] sm:$0xff]
    %v151 = vld [vmem:[#allocation2 + $0x1a0] sm:$0xff]
    %v152 = vld [vmem:[#allocation2 + $0x1a8] sm:$0xff]
    %v153 = vld [vmem:[#allocation2 + $0x1b0] sm:$0xff]
    %v154 = vld [vmem:[#allocation2 + $0x1b8] sm:$0xff]
    %v155 = vld [vmem:[#allocation2 + $0x1c0] sm:$0xff]
    %v156 = vld [vmem:[#allocation2 + $0x1c8] sm:$0xff]
    %v157 = vld [vmem:[#allocation2 + $0x1d0] sm:$0xff]
    %v158 = vld [vmem:[#allocation2 + $0x1d8] sm:$0xff]
    %v159 = vld [vmem:[#allocation2 + $0x1e0] sm:$0xff]
    %v160 = vld [vmem:[#allocation2 + $0x1e8] sm:$0xff]
    %v161 = vld [vmem:[#allocation2 + $0x1f0] sm:$0xff]
    %v162 = vld [vmem:[#allocation2 + $0x1f8] sm:$0xff]
    %v163 = vld [vmem:[#allocation2 + $0x200] sm:$0xff]
    %v164 = vld [vmem:[#allocation2 + $0x208] sm:$0xff]
    %v165 = vld [vmem:[#allocation2 + $0x210] sm:$0xff]
    %v166 = vld [vmem:[#allocation2 + $0x218] sm:$0xff]
    %v167 = vld [vmem:[#allocation2 + $0x220] sm:$0xff]
    %v168 = vld [vmem:[#allocation2 + $0x228] sm:$0xff]
    %v169 = vld [vmem:[#allocation2 + $0x230] sm:$0xff]
    %v170 = vld [vmem:[#allocation2 + $0x238] sm:$0xff]
    %v171 = vld [vmem:[#allocation2 + $0x240] sm:$0xff]
    %v172 = vld [vmem:[#allocation2 + $0x248] sm:$0xff]
    %v173 = vld [vmem:[#allocation2 + $0x250] sm:$0xff]
    %v174 = vld [vmem:[#allocation2 + $0x258] sm:$0xff]
    %v175 = vld [vmem:[#allocation2 + $0x260] sm:$0xff]
    %v176 = vld [vmem:[#allocation2 + $0x268] sm:$0xff]
    %v177 = vld [vmem:[#allocation2 + $0x270] sm:$0xff]
    %v178 = vld [vmem:[#allocation2 + $0x278] sm:$0xff]
    %v179 = vld [vmem:[#allocation2 + $0x280] sm:$0xff]
    %v180 = vld [vmem:[#allocation2 + $0x288] sm:$0xff]
    %v181 = vld [vmem:[#allocation2 + $0x290] sm:$0xff]
    %v182 = vld [vmem:[#allocation2 + $0x298] sm:$0xff]
    %v183 = vld [vmem:[#allocation2 + $0x2a0] sm:$0xff]
    %v184 = vld [vmem:[#allocation2 + $0x2a8] sm:$0xff]
    %v185 = vld [vmem:[#allocation2 + $0x2b0] sm:$0xff]
    %v186 = vld [vmem:[#allocation2 + $0x2b8] sm:$0xff]
    %v187 = vld [vmem:[#allocation2 + $0x2c0] sm:$0xff]
    %v188 = vld [vmem:[#allocation2 + $0x2c8] sm:$0xff]
    %v189 = vld [vmem:[#allocation2 + $0x2d0] sm:$0xff]
    %v190 = vld [vmem:[#allocation2 + $0x2d8] sm:$0xff]
    %v191 = vld [vmem:[#allocation2 + $0x2e0] sm:$0xff]
    %v192 = vld [vmem:[#allocation2 + $0x2e8] sm:$0xff]
    %v193 = vld [vmem:[#allocation2 + $0x2f0] sm:$0xff]
    %v194 = vld [vmem:[#allocation2 + $0x2f8] sm:$0xff]
    %v195 = vld [vmem:[#allocation2 + $0x300] sm:$0xff]
    %v196 = vld [vmem:[#allocation2 + $0x308] sm:$0xff]
    %v197 = vld [vmem:[#allocation2 + $0x310] sm:$0xff]
    %v198 = vld [vmem:[#allocation2 + $0x318] sm:$0xff]
    %v199 = vld [vmem:[#allocation2 + $0x320] sm:$0xff]
    %v200 = vld [vmem:[#allocation2 + $0x328] sm:$0xff]
    %v201 = vld [vmem:[#allocation2 + $0x330] sm:$0xff]
    %v202 = vld [vmem:[#allocation2 + $0x338] sm:$0xff]
    %v203 = vld [vmem:[#allocation2 + $0x340] sm:$0xff]
    %v204 = vld [vmem:[#allocation2 + $0x348] sm:$0xff]
    %v205 = vld [vmem:[#allocation2 + $0x350] sm:$0xff]
    %v206 = vld [vmem:[#allocation2 + $0x358] sm:$0xff]
    %v207 = vld [vmem:[#allocation2 + $0x360] sm:$0xff]
    %v208 = vld [vmem:[#allocation2 + $0x368] sm:$0xff]
    %v209 = vld [vmem:[#allocation2 + $0x370] sm:$0xff]
    %v210 = vld [vmem:[#allocation2 + $0x378] sm:$0xff]
    %v211 = vld [vmem:[#allocation2 + $0x380] sm:$0xff]
    %v212 = vld [vmem:[#allocation2 + $0x388] sm:$0xff]
    %v213 = vld [vmem:[#allocation2 + $0x390] sm:$0xff]
    %v214 = vld [vmem:[#allocation2 + $0x398] sm:$0xff]
    %v215 = vld [vmem:[#allocation2 + $0x3a0] sm:$0xff]
    %v216 = vld [vmem:[#allocation2 + $0x3a8] sm:$0xff]
    %v217 = vld [vmem:[#allocation2 + $0x3b0] sm:$0xff]
    %v218 = vld [vmem:[#allocation2 + $0x3b8] sm:$0xff]
    %v219 = vld [vmem:[#allocation2 + $0x3c0] sm:$0xff]
    %v220 = vld [vmem:[#allocation2 + $0x3c8] sm:$0xff]
    %v221 = vld [vmem:[#allocation2 + $0x3d0] sm:$0xff]
    %v222 = vld [vmem:[#allocation2 + $0x3d8] sm:$0xff]
    %v223 = vld [vmem:[#allocation2 + $0x3e0] sm:$0xff]
    %v224 = vld [vmem:[#allocation2 + $0x3e8] sm:$0xff]
    %v225 = vld [vmem:[#allocation2 + $0x3f0] sm:$0xff]
    %v226 = vld [vmem:[#allocation2 + $0x3f8] sm:$0xff]
    %v227 = vld [vmem:[#allocation2 + $0x400] sm:$0xff]
    %v228 = vld [vmem:[#allocation2 + $0x408] sm:$0xff]
    %v229 = vld [vmem:[#allocation2 + $0x410] sm:$0xff]
    %v230 = vld [vmem:[#allocation2 + $0x418] sm:$0xff]
    %v231 = vld [vmem:[#allocation2 + $0x420] sm:$0xff]
    %v232 = vld [vmem:[#allocation2 + $0x428] sm:$0xff]
    %v233 = vld [vmem:[#allocation2 + $0x430] sm:$0xff]
    %v234 = vld [vmem:[#allocation2 + $0x438] sm:$0xff]
    %v235 = vld [vmem:[#allocation2 + $0x440] sm:$0xff]
    %v236 = vld [vmem:[#allocation2 + $0x448] sm:$0xff]
    %v237 = vld [vmem:[#allocation2 + $0x450] sm:$0xff]
    %v238 = vld [vmem:[#allocation2 + $0x458] sm:$0xff]
    %v239 = vld [vmem:[#allocation2 + $0x460] sm:$0xff]
    %v240 = vld [vmem:[#allocation2 + $0x468] sm:$0xff]
    %v241 = vld [vmem:[#allocation2 + $0x470] sm:$0xff]
    %v242 = vld [vmem:[#allocation2 + $0x478] sm:$0xff]
    %v243 = vld [vmem:[#allocation2 + $0x480] sm:$0xff]
    %v244 = vld [vmem:[#allocation2 + $0x488] sm:$0xff]
    %v245 = vld [vmem:[#allocation2 + $0x490] sm:$0xff]
    %v246 = vld [vmem:[#allocation2 + $0x498] sm:$0xff]
    %v247 = vld [vmem:[#allocation2 + $0x4a0] sm:$0xff]
    %v248 = vld [vmem:[#allocation2 + $0x4a8] sm:$0xff]
    %v249 = vld [vmem:[#allocation2 + $0x4b0] sm:$0xff]
    %v250 = vld [vmem:[#allocation2 + $0x4b8] sm:$0xff]
    %v251 = vld [vmem:[#allocation2 + $0x4c0] sm:$0xff]
    %v252 = vld [vmem:[#allocation2 + $0x4c8] sm:$0xff]
    %v253 = vld [vmem:[#allocation2 + $0x4d0] sm:$0xff]
    %v254 = vld [vmem:[#allocation2 + $0x4d8] sm:$0xff]
    %v255 = vld [vmem:[#allocation2 + $0x4e0] sm:$0xff]
    %v256 = vld [vmem:[#allocation2 + $0x4e8] sm:$0xff]
    %v257 = vld [vmem:[#allocation2 + $0x4f0] sm:$0xff]
    %v258 = vld [vmem:[#allocation2 + $0x4f8] sm:$0xff]
    %v259 = vld [vmem:[#allocation2 + $0x500] sm:$0xff]
    %v260 = vld [vmem:[#allocation2 + $0x508] sm:$0xff]
    %v261 = vld [vmem:[#allocation2 + $0x510] sm:$0xff]
    %v262 = vld [vmem:[#allocation2 + $0x518] sm:$0xff]
    %v263 = vld [vmem:[#allocation2 + $0x520] sm:$0xff]
    %v264 = vld [vmem:[#allocation2 + $0x528] sm:$0xff]
    %v265 = vld [vmem:[#allocation2 + $0x530] sm:$0xff]
    %v266 = vld [vmem:[#allocation2 + $0x538] sm:$0xff]
    %v267 = vld [vmem:[#allocation2 + $0x540] sm:$0xff]
    %v268 = vld [vmem:[#allocation2 + $0x548] sm:$0xff]
    %v269 = vld [vmem:[#allocation2 + $0x550] sm:$0xff]
    %v270 = vld [vmem:[#allocation2 + $0x558] sm:$0xff]
    %v271 = vld [vmem:[#allocation2 + $0x560] sm:$0xff]
    %v272 = vld [vmem:[#allocation2 + $0x568] sm:$0xff]
    %v273 = vld [vmem:[#allocation2 + $0x570] sm:$0xff]
    %v274 = vld [vmem:[#allocation2 + $0x578] sm:$0xff]
    %v275 = vld [vmem:[#allocation2 + $0x580] sm:$0xff]
    %v276 = vld [vmem:[#allocation2 + $0x588] sm:$0xff]
    %v277 = vld [vmem:[#allocation2 + $0x590] sm:$0xff]
    %v278 = vld [vmem:[#allocation2 + $0x598] sm:$0xff]
    %v279 = vld [vmem:[#allocation2 + $0x5a0] sm:$0xff]
    %v280 = vld [vmem:[#allocation2 + $0x5a8] sm:$0xff]
    %v281 = vld [vmem:[#allocation2 + $0x5b0] sm:$0xff]
    %v282 = vld [vmem:[#allocation2 + $0x5b8] sm:$0xff]
    %v283 = vld [vmem:[#allocation2 + $0x5c0] sm:$0xff]
    %v284 = vld [vmem:[#allocation2 + $0x5c8] sm:$0xff]
    %v285 = vld [vmem:[#allocation2 + $0x5d0] sm:$0xff]
    %v286 = vld [vmem:[#allocation2 + $0x5d8] sm:$0xff]
    %v287 = vld [vmem:[#allocation2 + $0x5e0] sm:$0xff]
    %v288 = vld [vmem:[#allocation2 + $0x5e8] sm:$0xff]
    %v289 = vld [vmem:[#allocation2 + $0x5f0] sm:$0xff]
    %v290 = vld [vmem:[#allocation2 + $0x5f8] sm:$0xff]
    %v291 = vld [vmem:[#allocation2 + $0x600] sm:$0xff]
    %v292 = vld [vmem:[#allocation2 + $0x608] sm:$0xff]
    %v293 = vld [vmem:[#allocation2 + $0x610] sm:$0xff]
    %v294 = vld [vmem:[#allocation2 + $0x618] sm:$0xff]
    %v295 = vld [vmem:[#allocation2 + $0x620] sm:$0xff]
    %v296 = vld [vmem:[#allocation2 + $0x628] sm:$0xff]
    %v297 = vld [vmem:[#allocation2 + $0x630] sm:$0xff]
    %v298 = vld [vmem:[#allocation2 + $0x638] sm:$0xff]
    %v299 = vld [vmem:[#allocation2 + $0x640] sm:$0xff]
    %v300 = vld [vmem:[#allocation2 + $0x648] sm:$0xff]
    %v301 = vld [vmem:[#allocation2 + $0x650] sm:$0xff]
    %v302 = vld [vmem:[#allocation2 + $0x658] sm:$0xff]
    %v303 = vld [vmem:[#allocation2 + $0x660] sm:$0xff]
    %v304 = vld [vmem:[#allocation2 + $0x668] sm:$0xff]
    %v305 = vld [vmem:[#allocation2 + $0x670] sm:$0xff]
    %v306 = vld [vmem:[#allocation2 + $0x678] sm:$0xff]
    %v307 = vld [vmem:[#allocation2 + $0x680] sm:$0xff]
    %v308 = vld [vmem:[#allocation2 + $0x688] sm:$0xff]
    %v309 = vld [vmem:[#allocation2 + $0x690] sm:$0xff]
    %v310 = vld [vmem:[#allocation2 + $0x698] sm:$0xff]
    %v311 = vld [vmem:[#allocation2 + $0x6a0] sm:$0xff]
    %v312 = vld [vmem:[#allocation2 + $0x6a8] sm:$0xff]
    %v313 = vld [vmem:[#allocation2 + $0x6b0] sm:$0xff]
    %v314 = vld [vmem:[#allocation2 + $0x6b8] sm:$0xff]
    %v315 = vld [vmem:[#allocation2 + $0x6c0] sm:$0xff]
    %v316 = vld [vmem:[#allocation2 + $0x6c8] sm:$0xff]
    %v317 = vld [vmem:[#allocation2 + $0x6d0] sm:$0xff]
    %v318 = vld [vmem:[#allocation2 + $0x6d8] sm:$0xff]
    %v319 = vld [vmem:[#allocation2 + $0x6e0] sm:$0xff]
    %v320 = vld [vmem:[#allocation2 + $0x6e8] sm:$0xff]
    %v321 = vld [vmem:[#allocation2 + $0x6f0] sm:$0xff]
    %v322 = vld [vmem:[#allocation2 + $0x6f8] sm:$0xff]
    %v324 = vlaneseq
    %v325 = vshrl.u32 %v324, 7
    %v326 = vsub.s32 0, %v325
    %v327 = vrot.slane %v87, %v326
    %v328 = vlaneseq
    %v329 = vshrl.u32 %v328, 7
    %v330 = vsub.s32 1, %v329
    %v331 = vrot.slane %v87, %v330
    %v332 = vlaneseq
    %v333 = vshrl.u32 %v332, 7
    %v334 = vsub.s32 2, %v333
    %v335 = vrot.slane %v87, %v334
    %v336 = vlaneseq
    %v337 = vshrl.u32 %v336, 7
    %v338 = vsub.s32 3, %v337
    %v339 = vrot.slane %v87, %v338
    %v568 = vunpack.c.l.b16 %v99
    %v569 = vunpack.c.h.b16 %v99
    %v570 = vunpack.c.l.b16 %v100
    %v571 = vunpack.c.h.b16 %v100
    %v572 = vunpack.c.l.b16 %v101
    %v573 = vunpack.c.h.b16 %v101
    %v574 = vunpack.c.l.b16 %v102
    %v575 = vunpack.c.h.b16 %v102
    %v576 = vunpack.c.l.b16 %v103
    %v577 = vunpack.c.h.b16 %v103
    %v578 = vunpack.c.l.b16 %v104
    %v579 = vunpack.c.h.b16 %v104
    %v580 = vunpack.c.l.b16 %v105
    %v581 = vunpack.c.h.b16 %v105
    %v582 = vunpack.c.l.b16 %v106
    %v583 = vunpack.c.h.b16 %v106
    %v584 = vunpack.c.l.b16 %v107
    %v585 = vunpack.c.h.b16 %v107
    %v586 = vunpack.c.l.b16 %v108
    %v587 = vunpack.c.h.b16 %v108
    %v588 = vunpack.c.l.b16 %v109
    %v589 = vunpack.c.h.b16 %v109
    %v590 = vunpack.c.l.b16 %v110
    %v591 = vunpack.c.h.b16 %v110
    %v592 = vunpack.c.l.b16 %v111
    %v593 = vunpack.c.h.b16 %v111
    %v594 = vunpack.c.l.b16 %v112
    %v595 = vunpack.c.h.b16 %v112
    %v596 = vunpack.c.l.b16 %v113
    %v597 = vunpack.c.h.b16 %v113
    %v598 = vunpack.c.l.b16 %v114
    %v599 = vunpack.c.h.b16 %v114
    %v600 = vunpack.c.l.b16 %v115
    %v601 = vunpack.c.h.b16 %v115
    %v602 = vunpack.c.l.b16 %v116
    %v603 = vunpack.c.h.b16 %v116
    %v604 = vunpack.c.l.b16 %v117
    %v605 = vunpack.c.h.b16 %v117
    %v606 = vunpack.c.l.b16 %v118
    %v607 = vunpack.c.h.b16 %v118
    %v608 = vunpack.c.l.b16 %v119
    %v609 = vunpack.c.h.b16 %v119
    %v610 = vunpack.c.l.b16 %v120
    %v611 = vunpack.c.h.b16 %v120
    %v612 = vunpack.c.l.b16 %v121
    %v613 = vunpack.c.h.b16 %v121
    %v614 = vunpack.c.l.b16 %v122
    %v615 = vunpack.c.h.b16 %v122
    %v616 = vunpack.c.l.b16 %v123
    %v617 = vunpack.c.h.b16 %v123
    %v618 = vunpack.c.l.b16 %v124
    %v619 = vunpack.c.h.b16 %v124
    %v620 = vunpack.c.l.b16 %v125
    %v621 = vunpack.c.h.b16 %v125
    %v622 = vunpack.c.l.b16 %v126
    %v623 = vunpack.c.h.b16 %v126
    %v624 = vunpack.c.l.b16 %v127
    %v625 = vunpack.c.h.b16 %v127
    %v626 = vunpack.c.l.b16 %v128
    %v627 = vunpack.c.h.b16 %v128
    %v628 = vunpack.c.l.b16 %v129
    %v629 = vunpack.c.h.b16 %v129
    %v630 = vunpack.c.l.b16 %v130
    %v631 = vunpack.c.h.b16 %v130
    %v632 = vunpack.c.l.b16 %v131
    %v633 = vunpack.c.h.b16 %v131
    %v634 = vunpack.c.l.b16 %v132
    %v635 = vunpack.c.h.b16 %v132
    %v636 = vunpack.c.l.b16 %v133
    %v637 = vunpack.c.h.b16 %v133
    %v638 = vunpack.c.l.b16 %v134
    %v639 = vunpack.c.h.b16 %v134
    %v640 = vunpack.c.l.b16 %v135
    %v641 = vunpack.c.h.b16 %v135
    %v642 = vunpack.c.l.b16 %v136
    %v643 = vunpack.c.h.b16 %v136
    %v644 = vunpack.c.l.b16 %v137
    %v645 = vunpack.c.h.b16 %v137
    %v646 = vunpack.c.l.b16 %v138
    %v647 = vunpack.c.h.b16 %v138
    %v648 = vunpack.c.l.b16 %v139
    %v649 = vunpack.c.h.b16 %v139
    %v650 = vunpack.c.l.b16 %v140
    %v651 = vunpack.c.h.b16 %v140
    %v652 = vunpack.c.l.b16 %v141
    %v653 = vunpack.c.h.b16 %v141
    %v654 = vunpack.c.l.b16 %v142
    %v655 = vunpack.c.h.b16 %v142
    %v656 = vunpack.c.l.b16 %v143
    %v657 = vunpack.c.h.b16 %v143
    %v658 = vunpack.c.l.b16 %v144
    %v659 = vunpack.c.h.b16 %v144
    %v660 = vunpack.c.l.b16 %v145
    %v661 = vunpack.c.h.b16 %v145
    %v662 = vunpack.c.l.b16 %v146
    %v663 = vunpack.c.h.b16 %v146
    %v664 = vunpack.c.l.b16 %v147
    %v665 = vunpack.c.h.b16 %v147
    %v666 = vunpack.c.l.b16 %v148
    %v667 = vunpack.c.h.b16 %v148
    %v668 = vunpack.c.l.b16 %v149
    %v669 = vunpack.c.h.b16 %v149
    %v670 = vunpack.c.l.b16 %v150
    %v671 = vunpack.c.h.b16 %v150
    %v672 = vunpack.c.l.b16 %v151
    %v673 = vunpack.c.h.b16 %v151
    %v674 = vunpack.c.l.b16 %v152
    %v675 = vunpack.c.h.b16 %v152
    %v676 = vunpack.c.l.b16 %v153
    %v677 = vunpack.c.h.b16 %v153
    %v678 = vunpack.c.l.b16 %v154
    %v679 = vunpack.c.h.b16 %v154
    %v680 = vunpack.c.l.b16 %v155
    %v681 = vunpack.c.h.b16 %v155
    %v682 = vunpack.c.l.b16 %v156
    %v683 = vunpack.c.h.b16 %v156
    %v684 = vunpack.c.l.b16 %v157
    %v685 = vunpack.c.h.b16 %v157
    %v686 = vunpack.c.l.b16 %v158
    %v687 = vunpack.c.h.b16 %v158
    %v688 = vunpack.c.l.b16 %v159
    %v689 = vunpack.c.h.b16 %v159
    %v690 = vunpack.c.l.b16 %v160
    %v691 = vunpack.c.h.b16 %v160
    %v692 = vunpack.c.l.b16 %v161
    %v693 = vunpack.c.h.b16 %v161
    %v694 = vunpack.c.l.b16 %v162
    %v695 = vunpack.c.h.b16 %v162
    %v696 = vunpack.c.l.b16 %v163
    %v697 = vunpack.c.h.b16 %v163
    %v698 = vunpack.c.l.b16 %v164
    %v699 = vunpack.c.h.b16 %v164
    %v700 = vunpack.c.l.b16 %v165
    %v701 = vunpack.c.h.b16 %v165
    %v702 = vunpack.c.l.b16 %v166
    %v703 = vunpack.c.h.b16 %v166
    %v704 = vunpack.c.l.b16 %v167
    %v705 = vunpack.c.h.b16 %v167
    %v706 = vunpack.c.l.b16 %v168
    %v707 = vunpack.c.h.b16 %v168
    %v708 = vunpack.c.l.b16 %v169
    %v709 = vunpack.c.h.b16 %v169
    %v710 = vunpack.c.l.b16 %v170
    %v711 = vunpack.c.h.b16 %v170
    %v712 = vunpack.c.l.b16 %v171
    %v713 = vunpack.c.h.b16 %v171
    %v714 = vunpack.c.l.b16 %v172
    %v715 = vunpack.c.h.b16 %v172
    %v716 = vunpack.c.l.b16 %v173
    %v717 = vunpack.c.h.b16 %v173
    %v718 = vunpack.c.l.b16 %v174
    %v719 = vunpack.c.h.b16 %v174
    %v720 = vunpack.c.l.b16 %v175
    %v721 = vunpack.c.h.b16 %v175
    %v722 = vunpack.c.l.b16 %v176
    %v723 = vunpack.c.h.b16 %v176
    %v724 = vunpack.c.l.b16 %v177
    %v725 = vunpack.c.h.b16 %v177
    %v726 = vunpack.c.l.b16 %v178
    %v727 = vunpack.c.h.b16 %v178
    %v728 = vunpack.c.l.b16 %v179
    %v729 = vunpack.c.h.b16 %v179
    %v730 = vunpack.c.l.b16 %v180
    %v731 = vunpack.c.h.b16 %v180
    %v732 = vunpack.c.l.b16 %v181
    %v733 = vunpack.c.h.b16 %v181
    %v734 = vunpack.c.l.b16 %v182
    %v735 = vunpack.c.h.b16 %v182
    %v736 = vunpack.c.l.b16 %v183
    %v737 = vunpack.c.h.b16 %v183
    %v738 = vunpack.c.l.b16 %v184
    %v739 = vunpack.c.h.b16 %v184
    %v740 = vunpack.c.l.b16 %v185
    %v741 = vunpack.c.h.b16 %v185
    %v742 = vunpack.c.l.b16 %v186
    %v743 = vunpack.c.h.b16 %v186
    %v744 = vunpack.c.l.b16 %v187
    %v745 = vunpack.c.h.b16 %v187
    %v746 = vunpack.c.l.b16 %v188
    %v747 = vunpack.c.h.b16 %v188
    %v748 = vunpack.c.l.b16 %v189
    %v749 = vunpack.c.h.b16 %v189
    %v750 = vunpack.c.l.b16 %v190
    %v751 = vunpack.c.h.b16 %v190
    %v752 = vunpack.c.l.b16 %v191
    %v753 = vunpack.c.h.b16 %v191
    %v754 = vunpack.c.l.b16 %v192
    %v755 = vunpack.c.h.b16 %v192
    %v756 = vunpack.c.l.b16 %v193
    %v757 = vunpack.c.h.b16 %v193
    %v758 = vunpack.c.l.b16 %v194
    %v759 = vunpack.c.h.b16 %v194
    %v760 = vunpack.c.l.b16 %v195
    %v761 = vunpack.c.h.b16 %v195
    %v762 = vunpack.c.l.b16 %v196
    %v763 = vunpack.c.h.b16 %v196
    %v764 = vunpack.c.l.b16 %v197
    %v765 = vunpack.c.h.b16 %v197
    %v766 = vunpack.c.l.b16 %v198
    %v767 = vunpack.c.h.b16 %v198
    %v768 = vunpack.c.l.b16 %v199
    %v769 = vunpack.c.h.b16 %v199
    %v770 = vunpack.c.l.b16 %v200
    %v771 = vunpack.c.h.b16 %v200
    %v772 = vunpack.c.l.b16 %v201
    %v773 = vunpack.c.h.b16 %v201
    %v774 = vunpack.c.l.b16 %v202
    %v775 = vunpack.c.h.b16 %v202
    %v776 = vunpack.c.l.b16 %v203
    %v777 = vunpack.c.h.b16 %v203
    %v778 = vunpack.c.l.b16 %v204
    %v779 = vunpack.c.h.b16 %v204
    %v780 = vunpack.c.l.b16 %v205
    %v781 = vunpack.c.h.b16 %v205
    %v782 = vunpack.c.l.b16 %v206
    %v783 = vunpack.c.h.b16 %v206
    %v784 = vunpack.c.l.b16 %v207
    %v785 = vunpack.c.h.b16 %v207
    %v786 = vunpack.c.l.b16 %v208
    %v787 = vunpack.c.h.b16 %v208
    %v788 = vunpack.c.l.b16 %v209
    %v789 = vunpack.c.h.b16 %v209
    %v790 = vunpack.c.l.b16 %v210
    %v791 = vunpack.c.h.b16 %v210
    %v792 = vunpack.c.l.b16 %v211
    %v793 = vunpack.c.h.b16 %v211
    %v794 = vunpack.c.l.b16 %v212
    %v795 = vunpack.c.h.b16 %v212
    %v796 = vunpack.c.l.b16 %v213
    %v797 = vunpack.c.h.b16 %v213
    %v798 = vunpack.c.l.b16 %v214
    %v799 = vunpack.c.h.b16 %v214
    %v800 = vunpack.c.l.b16 %v215
    %v801 = vunpack.c.h.b16 %v215
    %v802 = vunpack.c.l.b16 %v216
    %v803 = vunpack.c.h.b16 %v216
    %v804 = vunpack.c.l.b16 %v217
    %v805 = vunpack.c.h.b16 %v217
    %v806 = vunpack.c.l.b16 %v218
    %v807 = vunpack.c.h.b16 %v218
    %v808 = vunpack.c.l.b16 %v219
    %v809 = vunpack.c.h.b16 %v219
    %v810 = vunpack.c.l.b16 %v220
    %v811 = vunpack.c.h.b16 %v220
    %v812 = vunpack.c.l.b16 %v221
    %v813 = vunpack.c.h.b16 %v221
    %v814 = vunpack.c.l.b16 %v222
    %v815 = vunpack.c.h.b16 %v222
    %v816 = vunpack.c.l.b16 %v223
    %v817 = vunpack.c.h.b16 %v223
    %v818 = vunpack.c.l.b16 %v224
    %v819 = vunpack.c.h.b16 %v224
    %v820 = vunpack.c.l.b16 %v225
    %v821 = vunpack.c.h.b16 %v225
    %v822 = vunpack.c.l.b16 %v226
    %v823 = vunpack.c.h.b16 %v226
    %v824 = vunpack.c.l.b16 %v227
    %v825 = vunpack.c.h.b16 %v227
    %v826 = vunpack.c.l.b16 %v228
    %v827 = vunpack.c.h.b16 %v228
    %v828 = vunpack.c.l.b16 %v229
    %v829 = vunpack.c.h.b16 %v229
    %v830 = vunpack.c.l.b16 %v230
    %v831 = vunpack.c.h.b16 %v230
    %v832 = vunpack.c.l.b16 %v231
    %v833 = vunpack.c.h.b16 %v231
    %v834 = vunpack.c.l.b16 %v232
    %v835 = vunpack.c.h.b16 %v232
    %v836 = vunpack.c.l.b16 %v233
    %v837 = vunpack.c.h.b16 %v233
    %v838 = vunpack.c.l.b16 %v234
    %v839 = vunpack.c.h.b16 %v234
    %v840 = vunpack.c.l.b16 %v235
    %v841 = vunpack.c.h.b16 %v235
    %v842 = vunpack.c.l.b16 %v236
    %v843 = vunpack.c.h.b16 %v236
    %v844 = vunpack.c.l.b16 %v237
    %v845 = vunpack.c.h.b16 %v237
    %v846 = vunpack.c.l.b16 %v238
    %v847 = vunpack.c.h.b16 %v238
    %v848 = vunpack.c.l.b16 %v239
    %v849 = vunpack.c.h.b16 %v239
    %v850 = vunpack.c.l.b16 %v240
    %v851 = vunpack.c.h.b16 %v240
    %v852 = vunpack.c.l.b16 %v241
    %v853 = vunpack.c.h.b16 %v241
    %v854 = vunpack.c.l.b16 %v242
    %v855 = vunpack.c.h.b16 %v242
    %v856 = vunpack.c.l.b16 %v243
    %v857 = vunpack.c.h.b16 %v243
    %v858 = vunpack.c.l.b16 %v244
    %v859 = vunpack.c.h.b16 %v244
    %v860 = vunpack.c.l.b16 %v245
    %v861 = vunpack.c.h.b16 %v245
    %v862 = vunpack.c.l.b16 %v246
    %v863 = vunpack.c.h.b16 %v246
    %v864 = vunpack.c.l.b16 %v247
    %v865 = vunpack.c.h.b16 %v247
    %v866 = vunpack.c.l.b16 %v248
    %v867 = vunpack.c.h.b16 %v248
    %v868 = vunpack.c.l.b16 %v249
    %v869 = vunpack.c.h.b16 %v249
    %v870 = vunpack.c.l.b16 %v250
    %v871 = vunpack.c.h.b16 %v250
    %v872 = vunpack.c.l.b16 %v251
    %v873 = vunpack.c.h.b16 %v251
    %v874 = vunpack.c.l.b16 %v252
    %v875 = vunpack.c.h.b16 %v252
    %v876 = vunpack.c.l.b16 %v253
    %v877 = vunpack.c.h.b16 %v253
    %v878 = vunpack.c.l.b16 %v254
    %v879 = vunpack.c.h.b16 %v254
    %v880 = vunpack.c.l.b16 %v255
    %v881 = vunpack.c.h.b16 %v255
    %v882 = vunpack.c.l.b16 %v256
    %v883 = vunpack.c.h.b16 %v256
    %v884 = vunpack.c.l.b16 %v257
    %v885 = vunpack.c.h.b16 %v257
    %v886 = vunpack.c.l.b16 %v258
    %v887 = vunpack.c.h.b16 %v258
    %v888 = vunpack.c.l.b16 %v259
    %v889 = vunpack.c.h.b16 %v259
    %v890 = vunpack.c.l.b16 %v260
    %v891 = vunpack.c.h.b16 %v260
    %v892 = vunpack.c.l.b16 %v261
    %v893 = vunpack.c.h.b16 %v261
    %v894 = vunpack.c.l.b16 %v262
    %v895 = vunpack.c.h.b16 %v262
    %v896 = vunpack.c.l.b16 %v263
    %v897 = vunpack.c.h.b16 %v263
    %v898 = vunpack.c.l.b16 %v264
    %v899 = vunpack.c.h.b16 %v264
    %v900 = vunpack.c.l.b16 %v265
    %v901 = vunpack.c.h.b16 %v265
    %v902 = vunpack.c.l.b16 %v266
    %v903 = vunpack.c.h.b16 %v266
    %v904 = vunpack.c.l.b16 %v267
    %v905 = vunpack.c.h.b16 %v267
    %v906 = vunpack.c.l.b16 %v268
    %v907 = vunpack.c.h.b16 %v268
    %v908 = vunpack.c.l.b16 %v269
    %v909 = vunpack.c.h.b16 %v269
    %v910 = vunpack.c.l.b16 %v270
    %v911 = vunpack.c.h.b16 %v270
    %v912 = vunpack.c.l.b16 %v271
    %v913 = vunpack.c.h.b16 %v271
    %v914 = vunpack.c.l.b16 %v272
    %v915 = vunpack.c.h.b16 %v272
    %v916 = vunpack.c.l.b16 %v273
    %v917 = vunpack.c.h.b16 %v273
    %v918 = vunpack.c.l.b16 %v274
    %v919 = vunpack.c.h.b16 %v274
    %v920 = vunpack.c.l.b16 %v275
    %v921 = vunpack.c.h.b16 %v275
    %v922 = vunpack.c.l.b16 %v276
    %v923 = vunpack.c.h.b16 %v276
    %v924 = vunpack.c.l.b16 %v277
    %v925 = vunpack.c.h.b16 %v277
    %v926 = vunpack.c.l.b16 %v278
    %v927 = vunpack.c.h.b16 %v278
    %v928 = vunpack.c.l.b16 %v279
    %v929 = vunpack.c.h.b16 %v279
    %v930 = vunpack.c.l.b16 %v280
    %v931 = vunpack.c.h.b16 %v280
    %v932 = vunpack.c.l.b16 %v281
    %v933 = vunpack.c.h.b16 %v281
    %v934 = vunpack.c.l.b16 %v282
    %v935 = vunpack.c.h.b16 %v282
    %v936 = vunpack.c.l.b16 %v283
    %v937 = vunpack.c.h.b16 %v283
    %v938 = vunpack.c.l.b16 %v284
    %v939 = vunpack.c.h.b16 %v284
    %v940 = vunpack.c.l.b16 %v285
    %v941 = vunpack.c.h.b16 %v285
    %v942 = vunpack.c.l.b16 %v286
    %v943 = vunpack.c.h.b16 %v286
    %v944 = vunpack.c.l.b16 %v287
    %v945 = vunpack.c.h.b16 %v287
    %v946 = vunpack.c.l.b16 %v288
    %v947 = vunpack.c.h.b16 %v288
    %v948 = vunpack.c.l.b16 %v289
    %v949 = vunpack.c.h.b16 %v289
    %v950 = vunpack.c.l.b16 %v290
    %v951 = vunpack.c.h.b16 %v290
    %v952 = vunpack.c.l.b16 %v291
    %v953 = vunpack.c.h.b16 %v291
    %v954 = vunpack.c.l.b16 %v292
    %v955 = vunpack.c.h.b16 %v292
    %v956 = vunpack.c.l.b16 %v293
    %v957 = vunpack.c.h.b16 %v293
    %v958 = vunpack.c.l.b16 %v294
    %v959 = vunpack.c.h.b16 %v294
    %v960 = vunpack.c.l.b16 %v295
    %v961 = vunpack.c.h.b16 %v295
    %v962 = vunpack.c.l.b16 %v296
    %v963 = vunpack.c.h.b16 %v296
    %v964 = vunpack.c.l.b16 %v297
    %v965 = vunpack.c.h.b16 %v297
    %v966 = vunpack.c.l.b16 %v298
    %v967 = vunpack.c.h.b16 %v298
    %v968 = vunpack.c.l.b16 %v299
    %v969 = vunpack.c.h.b16 %v299
    %v970 = vunpack.c.l.b16 %v300
    %v971 = vunpack.c.h.b16 %v300
    %v972 = vunpack.c.l.b16 %v301
    %v973 = vunpack.c.h.b16 %v301
    %v974 = vunpack.c.l.b16 %v302
    %v975 = vunpack.c.h.b16 %v302
    %v976 = vunpack.c.l.b16 %v303
    %v977 = vunpack.c.h.b16 %v303
    %v978 = vunpack.c.l.b16 %v304
    %v979 = vunpack.c.h.b16 %v304
    %v980 = vunpack.c.l.b16 %v305
    %v981 = vunpack.c.h.b16 %v305
    %v982 = vunpack.c.l.b16 %v306
    %v983 = vunpack.c.h.b16 %v306
    %v984 = vunpack.c.l.b16 %v307
    %v985 = vunpack.c.h.b16 %v307
    %v986 = vunpack.c.l.b16 %v308
    %v987 = vunpack.c.h.b16 %v308
    %v988 = vunpack.c.l.b16 %v309
    %v989 = vunpack.c.h.b16 %v309
    %v990 = vunpack.c.l.b16 %v310
    %v991 = vunpack.c.h.b16 %v310
    %v992 = vunpack.c.l.b16 %v311
    %v993 = vunpack.c.h.b16 %v311
    %v994 = vunpack.c.l.b16 %v312
    %v995 = vunpack.c.h.b16 %v312
    %v996 = vunpack.c.l.b16 %v313
    %v997 = vunpack.c.h.b16 %v313
    %v998 = vunpack.c.l.b16 %v314
    %v999 = vunpack.c.h.b16 %v314
    %v1000 = vunpack.c.l.b16 %v315
    %v1001 = vunpack.c.h.b16 %v315
    %v1002 = vunpack.c.l.b16 %v316
    %v1003 = vunpack.c.h.b16 %v316
    %v1004 = vunpack.c.l.b16 %v317
    %v1005 = vunpack.c.h.b16 %v317
    %v1006 = vunpack.c.l.b16 %v318
    %v1007 = vunpack.c.h.b16 %v318
    %v1008 = vunpack.c.l.b16 %v319
    %v1009 = vunpack.c.h.b16 %v319
    %v1010 = vunpack.c.l.b16 %v320
    %v1011 = vunpack.c.h.b16 %v320
    %v1012 = vunpack.c.l.b16 %v321
    %v1013 = vunpack.c.h.b16 %v321
    %v1014 = vunpack.c.l.b16 %v322
    %v1015 = vunpack.c.h.b16 %v322
    %v1016 = vpack.c.b16 %v572, %v568
    %v1017 = vpack.c.b16 %v573, %v569
    %v1018 = vpack.c.b16 %v574, %v570
    %v1019 = vpack.c.b16 %v575, %v571
    %v1020 = vpack.c.b16 %v580, %v576
    %v1021 = vpack.c.b16 %v581, %v577
    %v1022 = vpack.c.b16 %v582, %v578
    %v1023 = vpack.c.b16 %v583, %v579
    %v1024 = vpack.c.b16 %v588, %v584
    %v1025 = vpack.c.b16 %v589, %v585
    %v1026 = vpack.c.b16 %v590, %v586
    %v1027 = vpack.c.b16 %v591, %v587
    %v1028 = vpack.c.b16 %v596, %v592
    %v1029 = vpack.c.b16 %v597, %v593
    %v1030 = vpack.c.b16 %v598, %v594
    %v1031 = vpack.c.b16 %v599, %v595
    %v1032 = vpack.c.b16 %v604, %v600
    %v1033 = vpack.c.b16 %v605, %v601
    %v1034 = vpack.c.b16 %v606, %v602
    %v1035 = vpack.c.b16 %v607, %v603
    %v1036 = vpack.c.b16 %v612, %v608
    %v1037 = vpack.c.b16 %v613, %v609
    %v1038 = vpack.c.b16 %v614, %v610
    %v1039 = vpack.c.b16 %v615, %v611
    %v1040 = vpack.c.b16 %v620, %v616
    %v1041 = vpack.c.b16 %v621, %v617
    %v1042 = vpack.c.b16 %v622, %v618
    %v1043 = vpack.c.b16 %v623, %v619
    %v1044 = vpack.c.b16 %v628, %v624
    %v1045 = vpack.c.b16 %v629, %v625
    %v1046 = vpack.c.b16 %v630, %v626
    %v1047 = vpack.c.b16 %v631, %v627
    %v1048 = vpack.c.b16 %v636, %v632
    %v1049 = vpack.c.b16 %v637, %v633
    %v1050 = vpack.c.b16 %v638, %v634
    %v1051 = vpack.c.b16 %v639, %v635
    %v1052 = vpack.c.b16 %v644, %v640
    %v1053 = vpack.c.b16 %v645, %v641
    %v1054 = vpack.c.b16 %v646, %v642
    %v1055 = vpack.c.b16 %v647, %v643
    %v1056 = vpack.c.b16 %v652, %v648
    %v1057 = vpack.c.b16 %v653, %v649
    %v1058 = vpack.c.b16 %v654, %v650
    %v1059 = vpack.c.b16 %v655, %v651
    %v1060 = vpack.c.b16 %v660, %v656
    %v1061 = vpack.c.b16 %v661, %v657
    %v1062 = vpack.c.b16 %v662, %v658
    %v1063 = vpack.c.b16 %v663, %v659
    %v1064 = vpack.c.b16 %v668, %v664
    %v1065 = vpack.c.b16 %v669, %v665
    %v1066 = vpack.c.b16 %v670, %v666
    %v1067 = vpack.c.b16 %v671, %v667
    %v1068 = vpack.c.b16 %v676, %v672
    %v1069 = vpack.c.b16 %v677, %v673
    %v1070 = vpack.c.b16 %v678, %v674
    %v1071 = vpack.c.b16 %v679, %v675
    %v1072 = vpack.c.b16 %v684, %v680
    %v1073 = vpack.c.b16 %v685, %v681
    %v1074 = vpack.c.b16 %v686, %v682
    %v1075 = vpack.c.b16 %v687, %v683
    %v1076 = vpack.c.b16 %v692, %v688
    %v1077 = vpack.c.b16 %v693, %v689
    %v1078 = vpack.c.b16 %v694, %v690
    %v1079 = vpack.c.b16 %v695, %v691
    %v1080 = vpack.c.b16 %v700, %v696
    %v1081 = vpack.c.b16 %v701, %v697
    %v1082 = vpack.c.b16 %v702, %v698
    %v1083 = vpack.c.b16 %v703, %v699
    %v1084 = vpack.c.b16 %v708, %v704
    %v1085 = vpack.c.b16 %v709, %v705
    %v1086 = vpack.c.b16 %v710, %v706
    %v1087 = vpack.c.b16 %v711, %v707
    %v1088 = vpack.c.b16 %v716, %v712
    %v1089 = vpack.c.b16 %v717, %v713
    %v1090 = vpack.c.b16 %v718, %v714
    %v1091 = vpack.c.b16 %v719, %v715
    %v1092 = vpack.c.b16 %v724, %v720
    %v1093 = vpack.c.b16 %v725, %v721
    %v1094 = vpack.c.b16 %v726, %v722
    %v1095 = vpack.c.b16 %v727, %v723
    %v1096 = vpack.c.b16 %v732, %v728
    %v1097 = vpack.c.b16 %v733, %v729
    %v1098 = vpack.c.b16 %v734, %v730
    %v1099 = vpack.c.b16 %v735, %v731
    %v1100 = vpack.c.b16 %v740, %v736
    %v1101 = vpack.c.b16 %v741, %v737
    %v1102 = vpack.c.b16 %v742, %v738
    %v1103 = vpack.c.b16 %v743, %v739
    %v1104 = vpack.c.b16 %v748, %v744
    %v1105 = vpack.c.b16 %v749, %v745
    %v1106 = vpack.c.b16 %v750, %v746
    %v1107 = vpack.c.b16 %v751, %v747
    %v1108 = vpack.c.b16 %v756, %v752
    %v1109 = vpack.c.b16 %v757, %v753
    %v1110 = vpack.c.b16 %v758, %v754
    %v1111 = vpack.c.b16 %v759, %v755
    %v1112 = vpack.c.b16 %v764, %v760
    %v1113 = vpack.c.b16 %v765, %v761
    %v1114 = vpack.c.b16 %v766, %v762
    %v1115 = vpack.c.b16 %v767, %v763
    %v1116 = vpack.c.b16 %v772, %v768
    %v1117 = vpack.c.b16 %v773, %v769
    %v1118 = vpack.c.b16 %v774, %v770
    %v1119 = vpack.c.b16 %v775, %v771
    %v1120 = vpack.c.b16 %v780, %v776
    %v1121 = vpack.c.b16 %v781, %v777
    %v1122 = vpack.c.b16 %v782, %v778
    %v1123 = vpack.c.b16 %v783, %v779
    %v1124 = vpack.c.b16 %v788, %v784
    %v1125 = vpack.c.b16 %v789, %v785
    %v1126 = vpack.c.b16 %v790, %v786
    %v1127 = vpack.c.b16 %v791, %v787
    %v1128 = vpack.c.b16 %v796, %v792
    %v1129 = vpack.c.b16 %v797, %v793
    %v1130 = vpack.c.b16 %v798, %v794
    %v1131 = vpack.c.b16 %v799, %v795
    %v1132 = vpack.c.b16 %v804, %v800
    %v1133 = vpack.c.b16 %v805, %v801
    %v1134 = vpack.c.b16 %v806, %v802
    %v1135 = vpack.c.b16 %v807, %v803
    %v1136 = vpack.c.b16 %v812, %v808
    %v1137 = vpack.c.b16 %v813, %v809
    %v1138 = vpack.c.b16 %v814, %v810
    %v1139 = vpack.c.b16 %v815, %v811
    %v1140 = vpack.c.b16 %v820, %v816
    %v1141 = vpack.c.b16 %v821, %v817
    %v1142 = vpack.c.b16 %v822, %v818
    %v1143 = vpack.c.b16 %v823, %v819
    %v1144 = vpack.c.b16 %v828, %v824
    %v1145 = vpack.c.b16 %v829, %v825
    %v1146 = vpack.c.b16 %v830, %v826
    %v1147 = vpack.c.b16 %v831, %v827
    %v1148 = vpack.c.b16 %v836, %v832
    %v1149 = vpack.c.b16 %v837, %v833
    %v1150 = vpack.c.b16 %v838, %v834
    %v1151 = vpack.c.b16 %v839, %v835
    %v1152 = vpack.c.b16 %v844, %v840
    %v1153 = vpack.c.b16 %v845, %v841
    %v1154 = vpack.c.b16 %v846, %v842
    %v1155 = vpack.c.b16 %v847, %v843
    %v1156 = vpack.c.b16 %v852, %v848
    %v1157 = vpack.c.b16 %v853, %v849
    %v1158 = vpack.c.b16 %v854, %v850
    %v1159 = vpack.c.b16 %v855, %v851
    %v1160 = vpack.c.b16 %v860, %v856
    %v1161 = vpack.c.b16 %v861, %v857
    %v1162 = vpack.c.b16 %v862, %v858
    %v1163 = vpack.c.b16 %v863, %v859
    %v1164 = vpack.c.b16 %v868, %v864
    %v1165 = vpack.c.b16 %v869, %v865
    %v1166 = vpack.c.b16 %v870, %v866
    %v1167 = vpack.c.b16 %v871, %v867
    %v1168 = vpack.c.b16 %v876, %v872
    %v1169 = vpack.c.b16 %v877, %v873
    %v1170 = vpack.c.b16 %v878, %v874
    %v1171 = vpack.c.b16 %v879, %v875
    %v1172 = vpack.c.b16 %v884, %v880
    %v1173 = vpack.c.b16 %v885, %v881
    %v1174 = vpack.c.b16 %v886, %v882
    %v1175 = vpack.c.b16 %v887, %v883
    %v1176 = vpack.c.b16 %v892, %v888
    %v1177 = vpack.c.b16 %v893, %v889
    %v1178 = vpack.c.b16 %v894, %v890
    %v1179 = vpack.c.b16 %v895, %v891
    %v1180 = vpack.c.b16 %v900, %v896
    %v1181 = vpack.c.b16 %v901, %v897
    %v1182 = vpack.c.b16 %v902, %v898
    %v1183 = vpack.c.b16 %v903, %v899
    %v1184 = vpack.c.b16 %v908, %v904
    %v1185 = vpack.c.b16 %v909, %v905
    %v1186 = vpack.c.b16 %v910, %v906
    %v1187 = vpack.c.b16 %v911, %v907
    %v1188 = vpack.c.b16 %v916, %v912
    %v1189 = vpack.c.b16 %v917, %v913
    %v1190 = vpack.c.b16 %v918, %v914
    %v1191 = vpack.c.b16 %v919, %v915
    %v1192 = vpack.c.b16 %v924, %v920
    %v1193 = vpack.c.b16 %v925, %v921
    %v1194 = vpack.c.b16 %v926, %v922
    %v1195 = vpack.c.b16 %v927, %v923
    %v1196 = vpack.c.b16 %v932, %v928
    %v1197 = vpack.c.b16 %v933, %v929
    %v1198 = vpack.c.b16 %v934, %v930
    %v1199 = vpack.c.b16 %v935, %v931
    %v1200 = vpack.c.b16 %v940, %v936
    %v1201 = vpack.c.b16 %v941, %v937
    %v1202 = vpack.c.b16 %v942, %v938
    %v1203 = vpack.c.b16 %v943, %v939
    %v1204 = vpack.c.b16 %v948, %v944
    %v1205 = vpack.c.b16 %v949, %v945
    %v1206 = vpack.c.b16 %v950, %v946
    %v1207 = vpack.c.b16 %v951, %v947
    %v1208 = vpack.c.b16 %v956, %v952
    %v1209 = vpack.c.b16 %v957, %v953
    %v1210 = vpack.c.b16 %v958, %v954
    %v1211 = vpack.c.b16 %v959, %v955
    %v1212 = vpack.c.b16 %v964, %v960
    %v1213 = vpack.c.b16 %v965, %v961
    %v1214 = vpack.c.b16 %v966, %v962
    %v1215 = vpack.c.b16 %v967, %v963
    %v1216 = vpack.c.b16 %v972, %v968
    %v1217 = vpack.c.b16 %v973, %v969
    %v1218 = vpack.c.b16 %v974, %v970
    %v1219 = vpack.c.b16 %v975, %v971
    %v1220 = vpack.c.b16 %v980, %v976
    %v1221 = vpack.c.b16 %v981, %v977
    %v1222 = vpack.c.b16 %v982, %v978
    %v1223 = vpack.c.b16 %v983, %v979
    %v1224 = vpack.c.b16 %v988, %v984
    %v1225 = vpack.c.b16 %v989, %v985
    %v1226 = vpack.c.b16 %v990, %v986
    %v1227 = vpack.c.b16 %v991, %v987
    %v1228 = vpack.c.b16 %v996, %v992
    %v1229 = vpack.c.b16 %v997, %v993
    %v1230 = vpack.c.b16 %v998, %v994
    %v1231 = vpack.c.b16 %v999, %v995
    %v1232 = vpack.c.b16 %v1004, %v1000
    %v1233 = vpack.c.b16 %v1005, %v1001
    %v1234 = vpack.c.b16 %v1006, %v1002
    %v1235 = vpack.c.b16 %v1007, %v1003
    %v1236 = vpack.c.b16 %v1012, %v1008
    %v1237 = vpack.c.b16 %v1013, %v1009
    %v1238 = vpack.c.b16 %v1014, %v1010
    %v1239 = vpack.c.b16 %v1015, %v1011
    %1464 = vmatprep.subr.bf16.mxu0 %v1045
    %1465 = vmatpush1.bf16.msra.mxu0 %v1044
    %1466 = vmatprep.subr.bf16.mxu0 %v1041
    %1467 = vmatpush1.bf16.msra.mxu0 %v1040
    %1468 = vmatprep.subr.bf16.mxu0 %v1037
    %1469 = vmatpush1.bf16.msra.mxu0 %v1036
    %1470 = vmatprep.subr.bf16.mxu0 %v1033
    %1471 = vmatpush1.bf16.msra.mxu0 %v1032
    %1472 = vmatprep.subr.bf16.mxu0 %v1029
    %1473 = vmatpush1.bf16.msra.mxu0 %v1028
    %1474 = vmatprep.subr.bf16.mxu0 %v1025
    %1475 = vmatpush1.bf16.msra.mxu0 %v1024
    %1476 = vmatprep.subr.bf16.mxu0 %v1021
    %1477 = vmatpush1.bf16.msra.mxu0 %v1020
    %1478 = vmatprep.subr.bf16.mxu0 %v1017
    %1479 = vmatpush1.bf16.msra.mxu0 %v1016
    %1480 = vmatprep.subr.bf16.mxu0 %v1077
    %1481 = vmatpush2.bf16.msra.mxu0 %v1076
    %1482 = vmatprep.subr.bf16.mxu0 %v1073
    %1483 = vmatpush2.bf16.msra.mxu0 %v1072
    %1484 = vmatprep.subr.bf16.mxu0 %v1069
    %1485 = vmatpush2.bf16.msra.mxu0 %v1068
    %1486 = vmatprep.subr.bf16.mxu0 %v1065
    %1487 = vmatpush2.bf16.msra.mxu0 %v1064
    %1488 = vmatprep.subr.bf16.mxu0 %v1061
    %1489 = vmatpush2.bf16.msra.mxu0 %v1060
    %1490 = vmatprep.subr.bf16.mxu0 %v1057
    %1491 = vmatpush2.bf16.msra.mxu0 %v1056
    %1492 = vmatprep.subr.bf16.mxu0 %v1053
    %1493 = vmatpush2.bf16.msra.mxu0 %v1052
    %1494 = vmatprep.subr.bf16.mxu0 %v1049
    %1495 = vmatpush2.bf16.msra.mxu0 %v1048
    %1496 = vmatprep.mubr.bf16.mxu0 %v93
    %1497 = vmatmul.mubr.bf16.gmra.mxu0 %v92
    %v1498 = vpop.f32.mrf.mxu0
    %v1499 = vadd.f32 %v327, %v1498
    %v1500 = vpop.f32.mrf.mxu0
    %v1501 = vadd.f32 %v331, %v1500
    %v1502 = vpop.f32.mrf.mxu0
    %v1503 = vpop.f32.mrf.mxu0
    %1504 = vdwg.mxu0
    %1505 = vmatprep.subr.bf16.mxu0 %v1109
    %1506 = vmatpush1.bf16.msra.mxu0 %v1108
    %1507 = vmatprep.subr.bf16.mxu0 %v1105
    %1508 = vmatpush1.bf16.msra.mxu0 %v1104
    %1509 = vmatprep.subr.bf16.mxu0 %v1101
    %1510 = vmatpush1.bf16.msra.mxu0 %v1100
    %1511 = vmatprep.subr.bf16.mxu0 %v1097
    %1512 = vmatpush1.bf16.msra.mxu0 %v1096
    %1513 = vmatprep.subr.bf16.mxu0 %v1093
    %1514 = vmatpush1.bf16.msra.mxu0 %v1092
    %1515 = vmatprep.subr.bf16.mxu0 %v1089
    %1516 = vmatpush1.bf16.msra.mxu0 %v1088
    %1517 = vmatprep.subr.bf16.mxu0 %v1085
    %1518 = vmatpush1.bf16.msra.mxu0 %v1084
    %1519 = vmatprep.subr.bf16.mxu0 %v1081
    %1520 = vmatpush1.bf16.msra.mxu0 %v1080
    %1521 = vmatprep.subr.bf16.mxu0 %v1141
    %1522 = vmatpush2.bf16.msra.mxu0 %v1140
    %1523 = vmatprep.subr.bf16.mxu0 %v1137
    %1524 = vmatpush2.bf16.msra.mxu0 %v1136
    %1525 = vmatprep.subr.bf16.mxu0 %v1133
    %1526 = vmatpush2.bf16.msra.mxu0 %v1132
    %1527 = vmatprep.subr.bf16.mxu0 %v1129
    %1528 = vmatpush2.bf16.msra.mxu0 %v1128
    %1529 = vmatprep.subr.bf16.mxu0 %v1125
    %1530 = vmatpush2.bf16.msra.mxu0 %v1124
    %1531 = vmatprep.subr.bf16.mxu0 %v1121
    %1532 = vmatpush2.bf16.msra.mxu0 %v1120
    %1533 = vmatprep.subr.bf16.mxu0 %v1117
    %1534 = vmatpush2.bf16.msra.mxu0 %v1116
    %1535 = vmatprep.subr.bf16.mxu0 %v1113
    %1536 = vmatpush2.bf16.msra.mxu0 %v1112
    %1537 = vmatprep.mubr.bf16.mxu0 %v95
    %1538 = vmatmul.mubr.bf16.gmra.mxu0 %v94
    %v1539 = vpop.f32.mrf.mxu0
    %v1540 = vadd.f32 %v1499, %v1539
    %v1541 = vpop.f32.mrf.mxu0
    %v1542 = vadd.f32 %v1501, %v1541
    %v1543 = vpop.f32.mrf.mxu0
    %v1544 = vpop.f32.mrf.mxu0
    %1545 = vdwg.mxu0
    %1546 = vmatprep.subr.bf16.mxu0 %v1173
    %1547 = vmatpush1.bf16.msra.mxu0 %v1172
    %1548 = vmatprep.subr.bf16.mxu0 %v1169
    %1549 = vmatpush1.bf16.msra.mxu0 %v1168
    %1550 = vmatprep.subr.bf16.mxu0 %v1165
    %1551 = vmatpush1.bf16.msra.mxu0 %v1164
    %1552 = vmatprep.subr.bf16.mxu0 %v1161
    %1553 = vmatpush1.bf16.msra.mxu0 %v1160
    %1554 = vmatprep.subr.bf16.mxu0 %v1157
    %1555 = vmatpush1.bf16.msra.mxu0 %v1156
    %1556 = vmatprep.subr.bf16.mxu0 %v1153
    %1557 = vmatpush1.bf16.msra.mxu0 %v1152
    %1558 = vmatprep.subr.bf16.mxu0 %v1149
    %1559 = vmatpush1.bf16.msra.mxu0 %v1148
    %1560 = vmatprep.subr.bf16.mxu0 %v1145
    %1561 = vmatpush1.bf16.msra.mxu0 %v1144
    %1562 = vmatprep.subr.bf16.mxu0 %v1205
    %1563 = vmatpush2.bf16.msra.mxu0 %v1204
    %1564 = vmatprep.subr.bf16.mxu0 %v1201
    %1565 = vmatpush2.bf16.msra.mxu0 %v1200
    %1566 = vmatprep.subr.bf16.mxu0 %v1197
    %1567 = vmatpush2.bf16.msra.mxu0 %v1196
    %1568 = vmatprep.subr.bf16.mxu0 %v1193
    %1569 = vmatpush2.bf16.msra.mxu0 %v1192
    %1570 = vmatprep.subr.bf16.mxu0 %v1189
    %1571 = vmatpush2.bf16.msra.mxu0 %v1188
    %1572 = vmatprep.subr.bf16.mxu0 %v1185
    %1573 = vmatpush2.bf16.msra.mxu0 %v1184
    %1574 = vmatprep.subr.bf16.mxu0 %v1181
    %1575 = vmatpush2.bf16.msra.mxu0 %v1180
    %1576 = vmatprep.subr.bf16.mxu0 %v1177
    %1577 = vmatpush2.bf16.msra.mxu0 %v1176
    %1578 = vmatprep.mubr.bf16.mxu0 %v97
    %1579 = vmatmul.mubr.bf16.gmra.mxu0 %v96
    %v1580 = vpop.f32.mrf.mxu0
    %v1581 = vadd.f32 %v1540, %v1580
    %v1582 = vpop.f32.mrf.mxu0
    %v1583 = vadd.f32 %v1542, %v1582
    %v1584 = vpop.f32.mrf.mxu0
    %v1585 = vpop.f32.mrf.mxu0
    %1586 = vdwg.mxu0
    %1587 = vmatprep.subr.bf16.mxu0 %v1237
    %1588 = vmatpush1.bf16.msra.mxu0 %v1236
    %1589 = vmatprep.subr.bf16.mxu0 %v1233
    %1590 = vmatpush1.bf16.msra.mxu0 %v1232
    %1591 = vmatprep.subr.bf16.mxu0 %v1229
    %1592 = vmatpush1.bf16.msra.mxu0 %v1228
    %1593 = vmatprep.subr.bf16.mxu0 %v1225
    %1594 = vmatpush1.bf16.msra.mxu0 %v1224
    %1595 = vmatprep.subr.bf16.mxu0 %v1221
    %1596 = vmatpush1.bf16.msra.mxu0 %v1220
    %1597 = vmatprep.subr.bf16.mxu0 %v1217
    %1598 = vmatpush1.bf16.msra.mxu0 %v1216
    %1599 = vmatprep.subr.bf16.mxu0 %v1213
    %1600 = vmatpush1.bf16.msra.mxu0 %v1212
    %1601 = vmatprep.subr.bf16.mxu0 %v1209
    %1602 = vmatpush1.bf16.msra.mxu0 %v1208
    %1603 = vmatprep.subr.bf16.mxu0 0
    %1604 = vmatpush2.bf16.msra.mxu0 0
    %1605 = vmatprep.subr.bf16.mxu0 0
    %1606 = vmatpush2.bf16.msra.mxu0 0
    %1607 = vmatprep.subr.bf16.mxu0 0
    %1608 = vmatpush2.bf16.msra.mxu0 0
    %1609 = vmatprep.subr.bf16.mxu0 0
    %1610 = vmatpush2.bf16.msra.mxu0 0
    %1611 = vmatprep.subr.bf16.mxu0 0
    %1612 = vmatpush2.bf16.msra.mxu0 0
    %1613 = vmatprep.subr.bf16.mxu0 0
    %1614 = vmatpush2.bf16.msra.mxu0 0
    %1615 = vmatprep.subr.bf16.mxu0 0
    %1616 = vmatpush2.bf16.msra.mxu0 0
    %1617 = vmatprep.subr.bf16.mxu0 0
    %1618 = vmatpush2.bf16.msra.mxu0 0
    %1619 = vmatprep.mubr.bf16.mxu0 0
    %1620 = vmatmul.mubr.bf16.gmra.mxu0 %v98
    %v1621 = vpop.f32.mrf.mxu0
    %v1622 = vadd.f32 %v1581, %v1621
    %v1623 = vpop.f32.mrf.mxu0
    %v1624 = vadd.f32 %v1583, %v1623
    %v1625 = vpop.f32.mrf.mxu0
    %v1626 = vpop.f32.mrf.mxu0
    %1627 = vdwg.mxu0
    %1628 = vmatprep.subr.bf16.mxu0 %v1047
    %1629 = vmatpush1.bf16.msra.mxu0 %v1046
    %1630 = vmatprep.subr.bf16.mxu0 %v1043
    %1631 = vmatpush1.bf16.msra.mxu0 %v1042
    %1632 = vmatprep.subr.bf16.mxu0 %v1039
    %1633 = vmatpush1.bf16.msra.mxu0 %v1038
    %1634 = vmatprep.subr.bf16.mxu0 %v1035
    %1635 = vmatpush1.bf16.msra.mxu0 %v1034
    %1636 = vmatprep.subr.bf16.mxu0 %v1031
    %1637 = vmatpush1.bf16.msra.mxu0 %v1030
    %1638 = vmatprep.subr.bf16.mxu0 %v1027
    %1639 = vmatpush1.bf16.msra.mxu0 %v1026
    %1640 = vmatprep.subr.bf16.mxu0 %v1023
    %1641 = vmatpush1.bf16.msra.mxu0 %v1022
    %1642 = vmatprep.subr.bf16.mxu0 %v1019
    %1643 = vmatpush1.bf16.msra.mxu0 %v1018
    %1644 = vmatprep.subr.bf16.mxu0 %v1079
    %1645 = vmatpush2.bf16.msra.mxu0 %v1078
    %1646 = vmatprep.subr.bf16.mxu0 %v1075
    %1647 = vmatpush2.bf16.msra.mxu0 %v1074
    %1648 = vmatprep.subr.bf16.mxu0 %v1071
    %1649 = vmatpush2.bf16.msra.mxu0 %v1070
    %1650 = vmatprep.subr.bf16.mxu0 %v1067
    %1651 = vmatpush2.bf16.msra.mxu0 %v1066
    %1652 = vmatprep.subr.bf16.mxu0 %v1063
    %1653 = vmatpush2.bf16.msra.mxu0 %v1062
    %1654 = vmatprep.subr.bf16.mxu0 %v1059
    %1655 = vmatpush2.bf16.msra.mxu0 %v1058
    %1656 = vmatprep.subr.bf16.mxu0 %v1055
    %1657 = vmatpush2.bf16.msra.mxu0 %v1054
    %1658 = vmatprep.subr.bf16.mxu0 %v1051
    %1659 = vmatpush2.bf16.msra.mxu0 %v1050
    %1660 = vmatprep.mubr.bf16.mxu0 %v93
    %1661 = vmatmul.mubr.bf16.gmra.mxu0 %v92
    %v1662 = vpop.f32.mrf.mxu0
    %v1663 = vadd.f32 %v335, %v1662
    %v1664 = vpop.f32.mrf.mxu0
    %v1665 = vadd.f32 %v339, %v1664
    %v1666 = vpop.f32.mrf.mxu0
    %v1667 = vpop.f32.mrf.mxu0
    %1668 = vdwg.mxu0
    %1669 = vmatprep.subr.bf16.mxu0 %v1111
    %1670 = vmatpush1.bf16.msra.mxu0 %v1110
    %1671 = vmatprep.subr.bf16.mxu0 %v1107
    %1672 = vmatpush1.bf16.msra.mxu0 %v1106
    %1673 = vmatprep.subr.bf16.mxu0 %v1103
    %1674 = vmatpush1.bf16.msra.mxu0 %v1102
    %1675 = vmatprep.subr.bf16.mxu0 %v1099
    %1676 = vmatpush1.bf16.msra.mxu0 %v1098
    %1677 = vmatprep.subr.bf16.mxu0 %v1095
    %1678 = vmatpush1.bf16.msra.mxu0 %v1094
    %1679 = vmatprep.subr.bf16.mxu0 %v1091
    %1680 = vmatpush1.bf16.msra.mxu0 %v1090
    %1681 = vmatprep.subr.bf16.mxu0 %v1087
    %1682 = vmatpush1.bf16.msra.mxu0 %v1086
    %1683 = vmatprep.subr.bf16.mxu0 %v1083
    %1684 = vmatpush1.bf16.msra.mxu0 %v1082
    %1685 = vmatprep.subr.bf16.mxu0 %v1143
    %1686 = vmatpush2.bf16.msra.mxu0 %v1142
    %1687 = vmatprep.subr.bf16.mxu0 %v1139
    %1688 = vmatpush2.bf16.msra.mxu0 %v1138
    %1689 = vmatprep.subr.bf16.mxu0 %v1135
    %1690 = vmatpush2.bf16.msra.mxu0 %v1134
    %1691 = vmatprep.subr.bf16.mxu0 %v1131
    %1692 = vmatpush2.bf16.msra.mxu0 %v1130
    %1693 = vmatprep.subr.bf16.mxu0 %v1127
    %1694 = vmatpush2.bf16.msra.mxu0 %v1126
    %1695 = vmatprep.subr.bf16.mxu0 %v1123
    %1696 = vmatpush2.bf16.msra.mxu0 %v1122
    %1697 = vmatprep.subr.bf16.mxu0 %v1119
    %1698 = vmatpush2.bf16.msra.mxu0 %v1118
    %1699 = vmatprep.subr.bf16.mxu0 %v1115
    %1700 = vmatpush2.bf16.msra.mxu0 %v1114
    %1701 = vmatprep.mubr.bf16.mxu0 %v95
    %1702 = vmatmul.mubr.bf16.gmra.mxu0 %v94
    %v1703 = vpop.f32.mrf.mxu0
    %v1704 = vadd.f32 %v1663, %v1703
    %v1705 = vpop.f32.mrf.mxu0
    %v1706 = vadd.f32 %v1665, %v1705
    %v1707 = vpop.f32.mrf.mxu0
    %v1708 = vpop.f32.mrf.mxu0
    %1709 = vdwg.mxu0
    %1710 = vmatprep.subr.bf16.mxu0 %v1175
    %1711 = vmatpush1.bf16.msra.mxu0 %v1174
    %1712 = vmatprep.subr.bf16.mxu0 %v1171
    %1713 = vmatpush1.bf16.msra.mxu0 %v1170
    %1714 = vmatprep.subr.bf16.mxu0 %v1167
    %1715 = vmatpush1.bf16.msra.mxu0 %v1166
    %1716 = vmatprep.subr.bf16.mxu0 %v1163
    %1717 = vmatpush1.bf16.msra.mxu0 %v1162
    %1718 = vmatprep.subr.bf16.mxu0 %v1159
    %1719 = vmatpush1.bf16.msra.mxu0 %v1158
    %1720 = vmatprep.subr.bf16.mxu0 %v1155
    %1721 = vmatpush1.bf16.msra.mxu0 %v1154
    %1722 = vmatprep.subr.bf16.mxu0 %v1151
    %1723 = vmatpush1.bf16.msra.mxu0 %v1150
    %1724 = vmatprep.subr.bf16.mxu0 %v1147
    %1725 = vmatpush1.bf16.msra.mxu0 %v1146
    %1726 = vmatprep.subr.bf16.mxu0 %v1207
    %1727 = vmatpush2.bf16.msra.mxu0 %v1206
    %1728 = vmatprep.subr.bf16.mxu0 %v1203
    %1729 = vmatpush2.bf16.msra.mxu0 %v1202
    %1730 = vmatprep.subr.bf16.mxu0 %v1199
    %1731 = vmatpush2.bf16.msra.mxu0 %v1198
    %1732 = vmatprep.subr.bf16.mxu0 %v1195
    %1733 = vmatpush2.bf16.msra.mxu0 %v1194
    %1734 = vmatprep.subr.bf16.mxu0 %v1191
    %1735 = vmatpush2.bf16.msra.mxu0 %v1190
    %1736 = vmatprep.subr.bf16.mxu0 %v1187
    %1737 = vmatpush2.bf16.msra.mxu0 %v1186
    %1738 = vmatprep.subr.bf16.mxu0 %v1183
    %1739 = vmatpush2.bf16.msra.mxu0 %v1182
    %1740 = vmatprep.subr.bf16.mxu0 %v1179
    %1741 = vmatpush2.bf16.msra.mxu0 %v1178
    %1742 = vmatprep.mubr.bf16.mxu0 %v97
    %1743 = vmatmul.mubr.bf16.gmra.mxu0 %v96
    %v1744 = vpop.f32.mrf.mxu0
    %v1745 = vadd.f32 %v1704, %v1744
    %v1746 = vpop.f32.mrf.mxu0
    %v1747 = vadd.f32 %v1706, %v1746
    %v1748 = vpop.f32.mrf.mxu0
    %v1749 = vpop.f32.mrf.mxu0
    %1750 = vdwg.mxu0
    %1751 = vmatprep.subr.bf16.mxu0 %v1239
    %1752 = vmatpush1.bf16.msra.mxu0 %v1238
    %1753 = vmatprep.subr.bf16.mxu0 %v1235
    %1754 = vmatpush1.bf16.msra.mxu0 %v1234
    %1755 = vmatprep.subr.bf16.mxu0 %v1231
    %1756 = vmatpush1.bf16.msra.mxu0 %v1230
    %1757 = vmatprep.subr.bf16.mxu0 %v1227
    %1758 = vmatpush1.bf16.msra.mxu0 %v1226
    %1759 = vmatprep.subr.bf16.mxu0 %v1223
    %1760 = vmatpush1.bf16.msra.mxu0 %v1222
    %1761 = vmatprep.subr.bf16.mxu0 %v1219
    %1762 = vmatpush1.bf16.msra.mxu0 %v1218
    %1763 = vmatprep.subr.bf16.mxu0 %v1215
    %1764 = vmatpush1.bf16.msra.mxu0 %v1214
    %1765 = vmatprep.subr.bf16.mxu0 %v1211
    %1766 = vmatpush1.bf16.msra.mxu0 %v1210
    %1767 = vmatprep.subr.bf16.mxu0 0
    %1768 = vmatpush2.bf16.msra.mxu0 0
    %1769 = vmatprep.subr.bf16.mxu0 0
    %1770 = vmatpush2.bf16.msra.mxu0 0
    %1771 = vmatprep.subr.bf16.mxu0 0
    %1772 = vmatpush2.bf16.msra.mxu0 0
    %1773 = vmatprep.subr.bf16.mxu0 0
    %1774 = vmatpush2.bf16.msra.mxu0 0
    %1775 = vmatprep.subr.bf16.mxu0 0
    %1776 = vmatpush2.bf16.msra.mxu0 0
    %1777 = vmatprep.subr.bf16.mxu0 0
    %1778 = vmatpush2.bf16.msra.mxu0 0
    %1779 = vmatprep.subr.bf16.mxu0 0
    %1780 = vmatpush2.bf16.msra.mxu0 0
    %1781 = vmatprep.subr.bf16.mxu0 0
    %1782 = vmatpush2.bf16.msra.mxu0 0
    %1783 = vmatprep.mubr.bf16.mxu0 0
    %1784 = vmatmul.mubr.bf16.gmra.mxu0 %v98
    %v1785 = vpop.f32.mrf.mxu0
    %v1786 = vadd.f32 %v1745, %v1785
    %v1787 = vpop.f32.mrf.mxu0
    %v1788 = vadd.f32 %v1747, %v1787
    %v1789 = vpop.f32.mrf.mxu0
    %v1790 = vpop.f32.mrf.mxu0
    %1791 = vdwg.mxu0
    %v1792 = vmax.f32 %v1622, 0.0
    %v1793 = vmax.f32 %v1624, 0.0
    %v1794 = vmax.f32 %v1786, 0.0
    %v1795 = vmax.f32 %v1788, 0.0
    %v1796 = vrot.slane %v1792, 4
    %v1797 = vadd.f32 %v1792, %v1796
    %v1798 = vrot.slane %v1797, 2
    %v1799 = vadd.f32 %v1797, %v1798
    %v1800 = vrot.slane %v1799, 1
    %v1801 = vadd.f32 %v1799, %v1800
    %v1802 = vrot.slane %v1793, 4
    %v1803 = vadd.f32 %v1793, %v1802
    %v1804 = vrot.slane %v1803, 2
    %v1805 = vadd.f32 %v1803, %v1804
    %v1806 = vrot.slane %v1805, 1
    %v1807 = vadd.f32 %v1805, %v1806
    %v1808 = vrot.slane %v1794, 4
    %v1809 = vadd.f32 %v1794, %v1808
    %v1810 = vrot.slane %v1809, 2
    %v1811 = vadd.f32 %v1809, %v1810
    %v1812 = vrot.slane %v1811, 1
    %v1813 = vadd.f32 %v1811, %v1812
    %v1814 = vrot.slane %v1795, 4
    %v1815 = vadd.f32 %v1795, %v1814
    %v1816 = vrot.slane %v1815, 2
    %v1817 = vadd.f32 %v1815, %v1816
    %v1818 = vrot.slane %v1817, 1
    %v1819 = vadd.f32 %v1817, %v1818
    %v1820 = vmul.f32 %v1792, %v1792
    %v1821 = vmul.f32 %v1793, %v1793
    %v1822 = vmul.f32 %v1794, %v1794
    %v1823 = vmul.f32 %v1795, %v1795
    %v1824 = vrot.slane %v1820, 4
    %v1825 = vadd.f32 %v1820, %v1824
    %v1826 = vrot.slane %v1825, 2
    %v1827 = vadd.f32 %v1825, %v1826
    %v1828 = vrot.slane %v1827, 1
    %v1829 = vadd.f32 %v1827, %v1828
    %v1830 = vrot.slane %v1821, 4
    %v1831 = vadd.f32 %v1821, %v1830
    %v1832 = vrot.slane %v1831, 2
    %v1833 = vadd.f32 %v1831, %v1832
    %v1834 = vrot.slane %v1833, 1
    %v1835 = vadd.f32 %v1833, %v1834
    %v1836 = vrot.slane %v1822, 4
    %v1837 = vadd.f32 %v1822, %v1836
    %v1838 = vrot.slane %v1837, 2
    %v1839 = vadd.f32 %v1837, %v1838
    %v1840 = vrot.slane %v1839, 1
    %v1841 = vadd.f32 %v1839, %v1840
    %v1842 = vrot.slane %v1823, 4
    %v1843 = vadd.f32 %v1823, %v1842
    %v1844 = vrot.slane %v1843, 2
    %v1845 = vadd.f32 %v1843, %v1844
    %v1846 = vrot.slane %v1845, 1
    %v1847 = vadd.f32 %v1845, %v1846
    %v1848 = vmul.f32 %v1801, 0.125
    %v1849 = vmul.f32 %v1807, 0.125
    %v1850 = vmul.f32 %v1813, 0.125
    %v1851 = vmul.f32 %v1819, 0.125
    %v1852 = vmul.f32 %v1829, 0.125
    %v1853 = vmul.f32 %v1835, 0.125
    %v1854 = vmul.f32 %v1841, 0.125
    %v1855 = vmul.f32 %v1847, 0.125
    %v1856 = vmul.f32 %v1848, %v1848
    %v1857 = vmul.f32 %v1849, %v1849
    %v1858 = vmul.f32 %v1850, %v1850
    %v1859 = vmul.f32 %v1851, %v1851
    %v1860 = vsub.f32 %v1852, %v1856
    %v1861 = vsub.f32 %v1853, %v1857
    %v1862 = vsub.f32 %v1854, %v1858
    %v1863 = vsub.f32 %v1855, %v1859
    %v1864 = vmax.f32 %v1860, 0.0
    %v1865 = vmax.f32 %v1861, 0.0
    %v1866 = vmax.f32 %v1862, 0.0
    %v1867 = vmax.f32 %v1863, 0.0
    %v1868 = vadd.f32 %v1864, 1e-05
    %v1869 = vadd.f32 %v1865, 1e-05
    %v1870 = vadd.f32 %v1866, 1e-05
    %v1871 = vadd.f32 %v1867, 1e-05
    %v1872 = vrsqrt.pop %v1868
    %v1873 = vrsqrt.pop %v1869
    %v1874 = vrsqrt.pop %v1870
    %v1875 = vrsqrt.pop %v1871
    %v1880 = vcombine.low %v1872, %v1873
    %v1881 = vcombine.low %v1874, %v1875
    %v1883 = vunpack.c.l.s4 1966171168
    %v1884 = vunpack.c.0.s8 %v1883
    %v1885 = vlaneseq
    %v1886 = vshrl.u32 %v1885, 7
    %v1887 = vsub.s32 %v1884, %v1886
    %v1888 = vrot.slane %v1880, %v1887
    %v1890 = vunpack.c.l.s4 1966171168
    %v1891 = vunpack.c.0.s8 %v1890
    %v1892 = vlaneseq
    %v1893 = vshrl.u32 %v1892, 7
    %v1894 = vsub.s32 %v1891, %v1893
    %v1895 = vrot.slane %v1881, %v1894
    %v1896 = vcombine.low %v1888, %v1895
    %v1898 = vunpack.c.l.s4 1966171168
    %v1899 = vunpack.c.0.s8 %v1898
    %v1900 = vlaneseq
    %v1901 = vshrl.u32 %v1900, 7
    %v1902 = vsub.s32 %v1899, %v1901
    %v1903 = vrot.slane %v1896, %v1902
    %v1905 = vmul.f32 %v89, %v1903
    %v1907 = vlaneseq
    %v1908 = vshrl.u32 %v1907, 7
    %v1909 = vsub.s32 0, %v1908
    %v1910 = vrot.slane %v1905, %v1909
    %v1911 = vlaneseq
    %v1912 = vshrl.u32 %v1911, 7
    %v1913 = vsub.s32 1, %v1912
    %v1914 = vrot.slane %v1905, %v1913
    %v1915 = vlaneseq
    %v1916 = vshrl.u32 %v1915, 7
    %v1917 = vsub.s32 2, %v1916
    %v1918 = vrot.slane %v1905, %v1917
    %v1919 = vlaneseq
    %v1920 = vshrl.u32 %v1919, 7
    %v1921 = vsub.s32 3, %v1920
    %v1922 = vrot.slane %v1905, %v1921
    %v1927 = vmul.f32 %v1848, %v1910
    %v1928 = vmul.f32 %v1849, %v1914
    %v1929 = vmul.f32 %v1850, %v1918
    %v1930 = vmul.f32 %v1851, %v1922
    %v1935 = vcombine.low %v1927, %v1928
    %v1936 = vcombine.low %v1929, %v1930
    %v1938 = vunpack.c.l.s4 1966171168
    %v1939 = vunpack.c.0.s8 %v1938
    %v1940 = vlaneseq
    %v1941 = vshrl.u32 %v1940, 7
    %v1942 = vsub.s32 %v1939, %v1941
    %v1943 = vrot.slane %v1935, %v1942
    %v1945 = vunpack.c.l.s4 1966171168
    %v1946 = vunpack.c.0.s8 %v1945
    %v1947 = vlaneseq
    %v1948 = vshrl.u32 %v1947, 7
    %v1949 = vsub.s32 %v1946, %v1948
    %v1950 = vrot.slane %v1936, %v1949
    %v1951 = vcombine.low %v1943, %v1950
    %v1953 = vunpack.c.l.s4 1966171168
    %v1954 = vunpack.c.0.s8 %v1953
    %v1955 = vlaneseq
    %v1956 = vshrl.u32 %v1955, 7
    %v1957 = vsub.s32 %v1954, %v1956
    %v1958 = vrot.slane %v1951, %v1957
    %v1960 = vsub.f32 %v91, %v1958
    %v1961 = vmul.f32 %v1792, %v1910
    %v1962 = vmul.f32 %v1793, %v1914
    %v1963 = vmul.f32 %v1794, %v1918
    %v1964 = vmul.f32 %v1795, %v1922
    %v1966 = vlaneseq
    %v1967 = vshrl.u32 %v1966, 7
    %v1968 = vsub.s32 0, %v1967
    %v1969 = vrot.slane %v1960, %v1968
    %v1970 = vlaneseq
    %v1971 = vshrl.u32 %v1970, 7
    %v1972 = vsub.s32 1, %v1971
    %v1973 = vrot.slane %v1960, %v1972
    %v1974 = vlaneseq
    %v1975 = vshrl.u32 %v1974, 7
    %v1976 = vsub.s32 2, %v1975
    %v1977 = vrot.slane %v1960, %v1976
    %v1978 = vlaneseq
    %v1979 = vshrl.u32 %v1978, 7
    %v1980 = vsub.s32 3, %v1979
    %v1981 = vrot.slane %v1960, %v1980
    %v1986 = vadd.f32 %v1961, %v1969
    %v1987 = vadd.f32 %v1962, %v1973
    %v1988 = vadd.f32 %v1963, %v1977
    %v1989 = vadd.f32 %v1964, %v1981
    %s1990 = scalar_lea.vmem [#allocation8], 3
    %v1991 = vld [vmem:[%s1990] ss:$8 sm:$0x3]
    %s1992 = scalar_lea.vmem [#allocation8], 4
    %v1993 = vld [vmem:[%s1992] ss:$8 sm:$0x3]
    %s1994 = scalar_lea.vmem [#allocation8], 5
    %v1995 = vld [vmem:[%s1994] ss:$8 sm:$0x3]
    %v1996 = vpack.c.bf16 %v1986, %v1986
    %v1997 = vpack.c.bf16 %v1987, %v1987
    %v1998 = vpack.c.bf16 %v1988, %v1988
    %v1999 = vpack.c.bf16 %v1989, %v1989
    %v2000 = vld [vmem:[#allocation5] sm:$0xff]
    %v2001 = vld [vmem:[#allocation5 + $0x8] sm:$0xff]
    %v2002 = vld [vmem:[#allocation5 + $0x10] sm:$0xff]
    %v2003 = vld [vmem:[#allocation5 + $0x18] sm:$0xff]
    %v2004 = vld [vmem:[#allocation5 + $0x20] sm:$0xff]
    %v2005 = vld [vmem:[#allocation5 + $0x28] sm:$0xff]
    %v2006 = vld [vmem:[#allocation5 + $0x30] sm:$0xff]
    %v2007 = vld [vmem:[#allocation5 + $0x38] sm:$0xff]
    %v2008 = vld [vmem:[#allocation5 + $0x40] sm:$0xff]
    %v2009 = vld [vmem:[#allocation5 + $0x48] sm:$0xff]
    %v2010 = vld [vmem:[#allocation5 + $0x50] sm:$0xff]
    %v2011 = vld [vmem:[#allocation5 + $0x58] sm:$0xff]
    %v2012 = vld [vmem:[#allocation5 + $0x60] sm:$0xff]
    %v2013 = vld [vmem:[#allocation5 + $0x68] sm:$0xff]
    %v2014 = vld [vmem:[#allocation5 + $0x70] sm:$0xff]
    %v2015 = vld [vmem:[#allocation5 + $0x78] sm:$0xff]
    %v2016 = vld [vmem:[#allocation5 + $0x80] sm:$0xff]
    %v2017 = vld [vmem:[#allocation5 + $0x88] sm:$0xff]
    %v2018 = vld [vmem:[#allocation5 + $0x90] sm:$0xff]
    %v2019 = vld [vmem:[#allocation5 + $0x98] sm:$0xff]
    %v2020 = vld [vmem:[#allocation5 + $0xa0] sm:$0xff]
    %v2021 = vld [vmem:[#allocation5 + $0xa8] sm:$0xff]
    %v2022 = vld [vmem:[#allocation5 + $0xb0] sm:$0xff]
    %v2023 = vld [vmem:[#allocation5 + $0xb8] sm:$0xff]
    %v2024 = vld [vmem:[#allocation5 + $0xc0] sm:$0xff]
    %v2025 = vld [vmem:[#allocation5 + $0xc8] sm:$0xff]
    %v2026 = vld [vmem:[#allocation5 + $0xd0] sm:$0xff]
    %v2027 = vld [vmem:[#allocation5 + $0xd8] sm:$0xff]
    %v2028 = vld [vmem:[#allocation5 + $0xe0] sm:$0xff]
    %v2029 = vld [vmem:[#allocation5 + $0xe8] sm:$0xff]
    %v2030 = vld [vmem:[#allocation5 + $0xf0] sm:$0xff]
    %v2031 = vld [vmem:[#allocation5 + $0xf8] sm:$0xff]
    %v2032 = vld [vmem:[#allocation5 + $0x100] sm:$0xff]
    %v2033 = vld [vmem:[#allocation5 + $0x108] sm:$0xff]
    %v2034 = vld [vmem:[#allocation5 + $0x110] sm:$0xff]
    %v2035 = vld [vmem:[#allocation5 + $0x118] sm:$0xff]
    %v2036 = vld [vmem:[#allocation5 + $0x120] sm:$0xff]
    %v2037 = vld [vmem:[#allocation5 + $0x128] sm:$0xff]
    %v2038 = vld [vmem:[#allocation5 + $0x130] sm:$0xff]
    %v2039 = vld [vmem:[#allocation5 + $0x138] sm:$0xff]
    %v2040 = vld [vmem:[#allocation5 + $0x140] sm:$0xff]
    %v2041 = vld [vmem:[#allocation5 + $0x148] sm:$0xff]
    %v2042 = vld [vmem:[#allocation5 + $0x150] sm:$0xff]
    %v2043 = vld [vmem:[#allocation5 + $0x158] sm:$0xff]
    %v2044 = vld [vmem:[#allocation5 + $0x160] sm:$0xff]
    %v2045 = vld [vmem:[#allocation5 + $0x168] sm:$0xff]
    %v2046 = vld [vmem:[#allocation5 + $0x170] sm:$0xff]
    %v2047 = vld [vmem:[#allocation5 + $0x178] sm:$0xff]
    %v2048 = vld [vmem:[#allocation5 + $0x180] sm:$0xff]
    %v2049 = vld [vmem:[#allocation5 + $0x188] sm:$0xff]
    %v2050 = vld [vmem:[#allocation5 + $0x190] sm:$0xff]
    %v2051 = vld [vmem:[#allocation5 + $0x198] sm:$0xff]
    %v2052 = vld [vmem:[#allocation5 + $0x1a0] sm:$0xff]
    %v2053 = vld [vmem:[#allocation5 + $0x1a8] sm:$0xff]
    %v2054 = vld [vmem:[#allocation5 + $0x1b0] sm:$0xff]
    %v2055 = vld [vmem:[#allocation5 + $0x1b8] sm:$0xff]
    %v2056 = vld [vmem:[#allocation5 + $0x1c0] sm:$0xff]
    %v2057 = vld [vmem:[#allocation5 + $0x1c8] sm:$0xff]
    %v2058 = vld [vmem:[#allocation5 + $0x1d0] sm:$0xff]
    %v2059 = vld [vmem:[#allocation5 + $0x1d8] sm:$0xff]
    %v2060 = vld [vmem:[#allocation5 + $0x1e0] sm:$0xff]
    %v2061 = vld [vmem:[#allocation5 + $0x1e8] sm:$0xff]
    %v2062 = vld [vmem:[#allocation5 + $0x1f0] sm:$0xff]
    %v2063 = vld [vmem:[#allocation5 + $0x1f8] sm:$0xff]
    %v2065 = vlaneseq
    %v2066 = vshrl.u32 %v2065, 7
    %v2067 = vsub.s32 0, %v2066
    %v2068 = vrot.slane %v1991, %v2067
    %v2069 = vlaneseq
    %v2070 = vshrl.u32 %v2069, 7
    %v2071 = vsub.s32 1, %v2070
    %v2072 = vrot.slane %v1991, %v2071
    %v2139 = vunpack.c.l.b16 %v2000
    %v2140 = vunpack.c.h.b16 %v2000
    %v2141 = vunpack.c.l.b16 %v2001
    %v2142 = vunpack.c.h.b16 %v2001
    %v2143 = vunpack.c.l.b16 %v2002
    %v2144 = vunpack.c.h.b16 %v2002
    %v2145 = vunpack.c.l.b16 %v2003
    %v2146 = vunpack.c.h.b16 %v2003
    %v2147 = vunpack.c.l.b16 %v2004
    %v2148 = vunpack.c.h.b16 %v2004
    %v2149 = vunpack.c.l.b16 %v2005
    %v2150 = vunpack.c.h.b16 %v2005
    %v2151 = vunpack.c.l.b16 %v2006
    %v2152 = vunpack.c.h.b16 %v2006
    %v2153 = vunpack.c.l.b16 %v2007
    %v2154 = vunpack.c.h.b16 %v2007
    %v2155 = vunpack.c.l.b16 %v2008
    %v2156 = vunpack.c.h.b16 %v2008
    %v2157 = vunpack.c.l.b16 %v2009
    %v2158 = vunpack.c.h.b16 %v2009
    %v2159 = vunpack.c.l.b16 %v2010
    %v2160 = vunpack.c.h.b16 %v2010
    %v2161 = vunpack.c.l.b16 %v2011
    %v2162 = vunpack.c.h.b16 %v2011
    %v2163 = vunpack.c.l.b16 %v2012
    %v2164 = vunpack.c.h.b16 %v2012
    %v2165 = vunpack.c.l.b16 %v2013
    %v2166 = vunpack.c.h.b16 %v2013
    %v2167 = vunpack.c.l.b16 %v2014
    %v2168 = vunpack.c.h.b16 %v2014
    %v2169 = vunpack.c.l.b16 %v2015
    %v2170 = vunpack.c.h.b16 %v2015
    %v2171 = vunpack.c.l.b16 %v2016
    %v2172 = vunpack.c.h.b16 %v2016
    %v2173 = vunpack.c.l.b16 %v2017
    %v2174 = vunpack.c.h.b16 %v2017
    %v2175 = vunpack.c.l.b16 %v2018
    %v2176 = vunpack.c.h.b16 %v2018
    %v2177 = vunpack.c.l.b16 %v2019
    %v2178 = vunpack.c.h.b16 %v2019
    %v2179 = vunpack.c.l.b16 %v2020
    %v2180 = vunpack.c.h.b16 %v2020
    %v2181 = vunpack.c.l.b16 %v2021
    %v2182 = vunpack.c.h.b16 %v2021
    %v2183 = vunpack.c.l.b16 %v2022
    %v2184 = vunpack.c.h.b16 %v2022
    %v2185 = vunpack.c.l.b16 %v2023
    %v2186 = vunpack.c.h.b16 %v2023
    %v2187 = vunpack.c.l.b16 %v2024
    %v2188 = vunpack.c.h.b16 %v2024
    %v2189 = vunpack.c.l.b16 %v2025
    %v2190 = vunpack.c.h.b16 %v2025
    %v2191 = vunpack.c.l.b16 %v2026
    %v2192 = vunpack.c.h.b16 %v2026
    %v2193 = vunpack.c.l.b16 %v2027
    %v2194 = vunpack.c.h.b16 %v2027
    %v2195 = vunpack.c.l.b16 %v2028
    %v2196 = vunpack.c.h.b16 %v2028
    %v2197 = vunpack.c.l.b16 %v2029
    %v2198 = vunpack.c.h.b16 %v2029
    %v2199 = vunpack.c.l.b16 %v2030
    %v2200 = vunpack.c.h.b16 %v2030
    %v2201 = vunpack.c.l.b16 %v2031
    %v2202 = vunpack.c.h.b16 %v2031
    %v2203 = vunpack.c.l.b16 %v2032
    %v2204 = vunpack.c.h.b16 %v2032
    %v2205 = vunpack.c.l.b16 %v2033
    %v2206 = vunpack.c.h.b16 %v2033
    %v2207 = vunpack.c.l.b16 %v2034
    %v2208 = vunpack.c.h.b16 %v2034
    %v2209 = vunpack.c.l.b16 %v2035
    %v2210 = vunpack.c.h.b16 %v2035
    %v2211 = vunpack.c.l.b16 %v2036
    %v2212 = vunpack.c.h.b16 %v2036
    %v2213 = vunpack.c.l.b16 %v2037
    %v2214 = vunpack.c.h.b16 %v2037
    %v2215 = vunpack.c.l.b16 %v2038
    %v2216 = vunpack.c.h.b16 %v2038
    %v2217 = vunpack.c.l.b16 %v2039
    %v2218 = vunpack.c.h.b16 %v2039
    %v2219 = vunpack.c.l.b16 %v2040
    %v2220 = vunpack.c.h.b16 %v2040
    %v2221 = vunpack.c.l.b16 %v2041
    %v2222 = vunpack.c.h.b16 %v2041
    %v2223 = vunpack.c.l.b16 %v2042
    %v2224 = vunpack.c.h.b16 %v2042
    %v2225 = vunpack.c.l.b16 %v2043
    %v2226 = vunpack.c.h.b16 %v2043
    %v2227 = vunpack.c.l.b16 %v2044
    %v2228 = vunpack.c.h.b16 %v2044
    %v2229 = vunpack.c.l.b16 %v2045
    %v2230 = vunpack.c.h.b16 %v2045
    %v2231 = vunpack.c.l.b16 %v2046
    %v2232 = vunpack.c.h.b16 %v2046
    %v2233 = vunpack.c.l.b16 %v2047
    %v2234 = vunpack.c.h.b16 %v2047
    %v2235 = vunpack.c.l.b16 %v2048
    %v2236 = vunpack.c.h.b16 %v2048
    %v2237 = vunpack.c.l.b16 %v2049
    %v2238 = vunpack.c.h.b16 %v2049
    %v2239 = vunpack.c.l.b16 %v2050
    %v2240 = vunpack.c.h.b16 %v2050
    %v2241 = vunpack.c.l.b16 %v2051
    %v2242 = vunpack.c.h.b16 %v2051
    %v2243 = vunpack.c.l.b16 %v2052
    %v2244 = vunpack.c.h.b16 %v2052
    %v2245 = vunpack.c.l.b16 %v2053
    %v2246 = vunpack.c.h.b16 %v2053
    %v2247 = vunpack.c.l.b16 %v2054
    %v2248 = vunpack.c.h.b16 %v2054
    %v2249 = vunpack.c.l.b16 %v2055
    %v2250 = vunpack.c.h.b16 %v2055
    %v2251 = vunpack.c.l.b16 %v2056
    %v2252 = vunpack.c.h.b16 %v2056
    %v2253 = vunpack.c.l.b16 %v2057
    %v2254 = vunpack.c.h.b16 %v2057
    %v2255 = vunpack.c.l.b16 %v2058
    %v2256 = vunpack.c.h.b16 %v2058
    %v2257 = vunpack.c.l.b16 %v2059
    %v2258 = vunpack.c.h.b16 %v2059
    %v2259 = vunpack.c.l.b16 %v2060
    %v2260 = vunpack.c.h.b16 %v2060
    %v2261 = vunpack.c.l.b16 %v2061
    %v2262 = vunpack.c.h.b16 %v2061
    %v2263 = vunpack.c.l.b16 %v2062
    %v2264 = vunpack.c.h.b16 %v2062
    %v2265 = vunpack.c.l.b16 %v2063
    %v2266 = vunpack.c.h.b16 %v2063
    %v2267 = vpack.c.b16 %v2141, %v2139
    %v2268 = vpack.c.b16 %v2142, %v2140
    %v2269 = vpack.c.b16 %v2145, %v2143
    %v2270 = vpack.c.b16 %v2146, %v2144
    %v2271 = vpack.c.b16 %v2149, %v2147
    %v2272 = vpack.c.b16 %v2150, %v2148
    %v2273 = vpack.c.b16 %v2153, %v2151
    %v2274 = vpack.c.b16 %v2154, %v2152
    %v2275 = vpack.c.b16 %v2157, %v2155
    %v2276 = vpack.c.b16 %v2158, %v2156
    %v2277 = vpack.c.b16 %v2161, %v2159
    %v2278 = vpack.c.b16 %v2162, %v2160
    %v2279 = vpack.c.b16 %v2165, %v2163
    %v2280 = vpack.c.b16 %v2166, %v2164
    %v2281 = vpack.c.b16 %v2169, %v2167
    %v2282 = vpack.c.b16 %v2170, %v2168
    %v2283 = vpack.c.b16 %v2173, %v2171
    %v2284 = vpack.c.b16 %v2174, %v2172
    %v2285 = vpack.c.b16 %v2177, %v2175
    %v2286 = vpack.c.b16 %v2178, %v2176
    %v2287 = vpack.c.b16 %v2181, %v2179
    %v2288 = vpack.c.b16 %v2182, %v2180
    %v2289 = vpack.c.b16 %v2185, %v2183
    %v2290 = vpack.c.b16 %v2186, %v2184
    %v2291 = vpack.c.b16 %v2189, %v2187
    %v2292 = vpack.c.b16 %v2190, %v2188
    %v2293 = vpack.c.b16 %v2193, %v2191
    %v2294 = vpack.c.b16 %v2194, %v2192
    %v2295 = vpack.c.b16 %v2197, %v2195
    %v2296 = vpack.c.b16 %v2198, %v2196
    %v2297 = vpack.c.b16 %v2201, %v2199
    %v2298 = vpack.c.b16 %v2202, %v2200
    %v2299 = vpack.c.b16 %v2205, %v2203
    %v2300 = vpack.c.b16 %v2206, %v2204
    %v2301 = vpack.c.b16 %v2209, %v2207
    %v2302 = vpack.c.b16 %v2210, %v2208
    %v2303 = vpack.c.b16 %v2213, %v2211
    %v2304 = vpack.c.b16 %v2214, %v2212
    %v2305 = vpack.c.b16 %v2217, %v2215
    %v2306 = vpack.c.b16 %v2218, %v2216
    %v2307 = vpack.c.b16 %v2221, %v2219
    %v2308 = vpack.c.b16 %v2222, %v2220
    %v2309 = vpack.c.b16 %v2225, %v2223
    %v2310 = vpack.c.b16 %v2226, %v2224
    %v2311 = vpack.c.b16 %v2229, %v2227
    %v2312 = vpack.c.b16 %v2230, %v2228
    %v2313 = vpack.c.b16 %v2233, %v2231
    %v2314 = vpack.c.b16 %v2234, %v2232
    %v2315 = vpack.c.b16 %v2237, %v2235
    %v2316 = vpack.c.b16 %v2238, %v2236
    %v2317 = vpack.c.b16 %v2241, %v2239
    %v2318 = vpack.c.b16 %v2242, %v2240
    %v2319 = vpack.c.b16 %v2245, %v2243
    %v2320 = vpack.c.b16 %v2246, %v2244
    %v2321 = vpack.c.b16 %v2249, %v2247
    %v2322 = vpack.c.b16 %v2250, %v2248
    %v2323 = vpack.c.b16 %v2253, %v2251
    %v2324 = vpack.c.b16 %v2254, %v2252
    %v2325 = vpack.c.b16 %v2257, %v2255
    %v2326 = vpack.c.b16 %v2258, %v2256
    %v2327 = vpack.c.b16 %v2261, %v2259
    %v2328 = vpack.c.b16 %v2262, %v2260
    %v2329 = vpack.c.b16 %v2265, %v2263
    %v2330 = vpack.c.b16 %v2266, %v2264
    %2395 = vmatprep.subr.bf16.mxu0 %v2282
    %2396 = vmatpush1.bf16.msra.mxu0 %v2281
    %2397 = vmatprep.subr.bf16.mxu0 %v2280
    %2398 = vmatpush1.bf16.msra.mxu0 %v2279
    %2399 = vmatprep.subr.bf16.mxu0 %v2278
    %2400 = vmatpush1.bf16.msra.mxu0 %v2277
    %2401 = vmatprep.subr.bf16.mxu0 %v2276
    %2402 = vmatpush1.bf16.msra.mxu0 %v2275
    %2403 = vmatprep.subr.bf16.mxu0 %v2274
    %2404 = vmatpush1.bf16.msra.mxu0 %v2273
    %2405 = vmatprep.subr.bf16.mxu0 %v2272
    %2406 = vmatpush1.bf16.msra.mxu0 %v2271
    %2407 = vmatprep.subr.bf16.mxu0 %v2270
    %2408 = vmatpush1.bf16.msra.mxu0 %v2269
    %2409 = vmatprep.subr.bf16.mxu0 %v2268
    %2410 = vmatpush1.bf16.msra.mxu0 %v2267
    %2411 = vmatprep.subr.bf16.mxu0 %v2298
    %2412 = vmatpush2.bf16.msra.mxu0 %v2297
    %2413 = vmatprep.subr.bf16.mxu0 %v2296
    %2414 = vmatpush2.bf16.msra.mxu0 %v2295
    %2415 = vmatprep.subr.bf16.mxu0 %v2294
    %2416 = vmatpush2.bf16.msra.mxu0 %v2293
    %2417 = vmatprep.subr.bf16.mxu0 %v2292
    %2418 = vmatpush2.bf16.msra.mxu0 %v2291
    %2419 = vmatprep.subr.bf16.mxu0 %v2290
    %2420 = vmatpush2.bf16.msra.mxu0 %v2289
    %2421 = vmatprep.subr.bf16.mxu0 %v2288
    %2422 = vmatpush2.bf16.msra.mxu0 %v2287
    %2423 = vmatprep.subr.bf16.mxu0 %v2286
    %2424 = vmatpush2.bf16.msra.mxu0 %v2285
    %2425 = vmatprep.subr.bf16.mxu0 %v2284
    %2426 = vmatpush2.bf16.msra.mxu0 %v2283
    %2427 = vmatprep.mubr.bf16.mxu0 %v1997
    %2428 = vmatmul.mubr.bf16.gmra.mxu0 %v1996
    %v2429 = vpop.f32.mrf.mxu0
    %v2430 = vadd.f32 %v2068, %v2429
    %v2431 = vpop.f32.mrf.mxu0
    %v2432 = vadd.f32 %v2072, %v2431
    %v2433 = vpop.f32.mrf.mxu0
    %v2434 = vpop.f32.mrf.mxu0
    %2435 = vdwg.mxu0
    %2436 = vmatprep.subr.bf16.mxu0 %v2314
    %2437 = vmatpush1.bf16.msra.mxu0 %v2313
    %2438 = vmatprep.subr.bf16.mxu0 %v2312
    %2439 = vmatpush1.bf16.msra.mxu0 %v2311
    %2440 = vmatprep.subr.bf16.mxu0 %v2310
    %2441 = vmatpush1.bf16.msra.mxu0 %v2309
    %2442 = vmatprep.subr.bf16.mxu0 %v2308
    %2443 = vmatpush1.bf16.msra.mxu0 %v2307
    %2444 = vmatprep.subr.bf16.mxu0 %v2306
    %2445 = vmatpush1.bf16.msra.mxu0 %v2305
    %2446 = vmatprep.subr.bf16.mxu0 %v2304
    %2447 = vmatpush1.bf16.msra.mxu0 %v2303
    %2448 = vmatprep.subr.bf16.mxu0 %v2302
    %2449 = vmatpush1.bf16.msra.mxu0 %v2301
    %2450 = vmatprep.subr.bf16.mxu0 %v2300
    %2451 = vmatpush1.bf16.msra.mxu0 %v2299
    %2452 = vmatprep.subr.bf16.mxu0 %v2330
    %2453 = vmatpush2.bf16.msra.mxu0 %v2329
    %2454 = vmatprep.subr.bf16.mxu0 %v2328
    %2455 = vmatpush2.bf16.msra.mxu0 %v2327
    %2456 = vmatprep.subr.bf16.mxu0 %v2326
    %2457 = vmatpush2.bf16.msra.mxu0 %v2325
    %2458 = vmatprep.subr.bf16.mxu0 %v2324
    %2459 = vmatpush2.bf16.msra.mxu0 %v2323
    %2460 = vmatprep.subr.bf16.mxu0 %v2322
    %2461 = vmatpush2.bf16.msra.mxu0 %v2321
    %2462 = vmatprep.subr.bf16.mxu0 %v2320
    %2463 = vmatpush2.bf16.msra.mxu0 %v2319
    %2464 = vmatprep.subr.bf16.mxu0 %v2318
    %2465 = vmatpush2.bf16.msra.mxu0 %v2317
    %2466 = vmatprep.subr.bf16.mxu0 %v2316
    %2467 = vmatpush2.bf16.msra.mxu0 %v2315
    %2468 = vmatprep.mubr.bf16.mxu0 %v1999
    %2469 = vmatmul.mubr.bf16.gmra.mxu0 %v1998
    %v2470 = vpop.f32.mrf.mxu0
    %v2471 = vadd.f32 %v2430, %v2470
    %v2472 = vpop.f32.mrf.mxu0
    %v2473 = vadd.f32 %v2432, %v2472
    %v2474 = vpop.f32.mrf.mxu0
    %v2475 = vpop.f32.mrf.mxu0
    %2476 = vdwg.mxu0
    %v2477 = vmax.f32 %v2471, 0.0
    %v2478 = vmax.f32 %v2473, 0.0
    %v2479 = vrot.slane %v2477, 4
    %v2480 = vadd.f32 %v2477, %v2479
    %v2481 = vrot.slane %v2480, 2
    %v2482 = vadd.f32 %v2480, %v2481
    %v2483 = vrot.slane %v2482, 1
    %v2484 = vadd.f32 %v2482, %v2483
    %v2485 = vrot.slane %v2478, 4
    %v2486 = vadd.f32 %v2478, %v2485
    %v2487 = vrot.slane %v2486, 2
    %v2488 = vadd.f32 %v2486, %v2487
    %v2489 = vrot.slane %v2488, 1
    %v2490 = vadd.f32 %v2488, %v2489
    %v2491 = vmul.f32 %v2477, %v2477
    %v2492 = vmul.f32 %v2478, %v2478
    %v2493 = vrot.slane %v2491, 4
    %v2494 = vadd.f32 %v2491, %v2493
    %v2495 = vrot.slane %v2494, 2
    %v2496 = vadd.f32 %v2494, %v2495
    %v2497 = vrot.slane %v2496, 1
    %v2498 = vadd.f32 %v2496, %v2497
    %v2499 = vrot.slane %v2492, 4
    %v2500 = vadd.f32 %v2492, %v2499
    %v2501 = vrot.slane %v2500, 2
    %v2502 = vadd.f32 %v2500, %v2501
    %v2503 = vrot.slane %v2502, 1
    %v2504 = vadd.f32 %v2502, %v2503
    %v2505 = vmul.f32 %v2484, 0.125
    %v2506 = vmul.f32 %v2490, 0.125
    %v2507 = vmul.f32 %v2498, 0.125
    %v2508 = vmul.f32 %v2504, 0.125
    %v2509 = vmul.f32 %v2505, %v2505
    %v2510 = vmul.f32 %v2506, %v2506
    %v2511 = vsub.f32 %v2507, %v2509
    %v2512 = vsub.f32 %v2508, %v2510
    %v2513 = vmax.f32 %v2511, 0.0
    %v2514 = vmax.f32 %v2512, 0.0
    %v2515 = vadd.f32 %v2513, 1e-05
    %v2516 = vadd.f32 %v2514, 1e-05
    %v2517 = vrsqrt.pop %v2515
    %v2518 = vrsqrt.pop %v2516
    %v2521 = vcombine.low %v2517, %v2518
    %v2523 = vunpack.c.l.s4 1966171168
    %v2524 = vunpack.c.0.s8 %v2523
    %v2525 = vlaneseq
    %v2526 = vshrl.u32 %v2525, 7
    %v2527 = vsub.s32 %v2524, %v2526
    %v2528 = vrot.slane %v2521, %v2527
    %v2530 = vunpack.c.l.s4 1966171168
    %v2531 = vunpack.c.0.s8 %v2530
    %v2532 = vlaneseq
    %v2533 = vshrl.u32 %v2532, 7
    %v2534 = vsub.s32 %v2531, %v2533
    %v2535 = vrot.slane %v2528, %v2534
    %v2537 = vmul.f32 %v1993, %v2535
    %v2539 = vlaneseq
    %v2540 = vshrl.u32 %v2539, 7
    %v2541 = vsub.s32 0, %v2540
    %v2542 = vrot.slane %v2537, %v2541
    %v2543 = vlaneseq
    %v2544 = vshrl.u32 %v2543, 7
    %v2545 = vsub.s32 1, %v2544
    %v2546 = vrot.slane %v2537, %v2545
    %v2549 = vmul.f32 %v2505, %v2542
    %v2550 = vmul.f32 %v2506, %v2546
    %v2553 = vcombine.low %v2549, %v2550
    %v2555 = vunpack.c.l.s4 1966171168
    %v2556 = vunpack.c.0.s8 %v2555
    %v2557 = vlaneseq
    %v2558 = vshrl.u32 %v2557, 7
    %v2559 = vsub.s32 %v2556, %v2558
    %v2560 = vrot.slane %v2553, %v2559
    %v2562 = vunpack.c.l.s4 1966171168
    %v2563 = vunpack.c.0.s8 %v2562
    %v2564 = vlaneseq
    %v2565 = vshrl.u32 %v2564, 7
    %v2566 = vsub.s32 %v2563, %v2565
    %v2567 = vrot.slane %v2560, %v2566
    %v2569 = vsub.f32 %v1995, %v2567
    %v2570 = vmul.f32 %v2477, %v2542
    %v2571 = vmul.f32 %v2478, %v2546
    %v2573 = vlaneseq
    %v2574 = vshrl.u32 %v2573, 7
    %v2575 = vsub.s32 0, %v2574
    %v2576 = vrot.slane %v2569, %v2575
    %v2577 = vlaneseq
    %v2578 = vshrl.u32 %v2577, 7
    %v2579 = vsub.s32 1, %v2578
    %v2580 = vrot.slane %v2569, %v2579
    %v2583 = vadd.f32 %v2570, %v2576
    %v2584 = vadd.f32 %v2571, %v2580
    %v2585 = vld [vmem:[#allocation8 + $0x6] ss:$0 sm:$0xff]
    %v2586 = vld [vmem:[#allocation8 + $0x7] ss:$0 sm:$0xff]
    %v2587 = vld [vmem:[#allocation8 + $0x20] ss:$0 sm:$0xff]
    %v2588 = vpack.c.bf16 %v2583, %v2583
    %v2589 = vpack.c.bf16 %v2584, %v2584
    %v2590 = vld [vmem:[#allocation7] sm:$0xf]
    %v2591 = vld [vmem:[#allocation7 + $0x4] sm:$0xf]
    %v2592 = vld [vmem:[#allocation7 + $0x8] sm:$0xf]
    %v2593 = vld [vmem:[#allocation7 + $0xc] sm:$0xf]
    %v2594 = vld [vmem:[#allocation7 + $0x10] sm:$0xf]
    %v2595 = vld [vmem:[#allocation7 + $0x14] sm:$0xf]
    %v2596 = vld [vmem:[#allocation7 + $0x18] sm:$0xf]
    %v2597 = vld [vmem:[#allocation7 + $0x1c] sm:$0xf]
    %v2598 = vld [vmem:[#allocation7 + $0x20] sm:$0xf]
    %v2599 = vld [vmem:[#allocation7 + $0x24] sm:$0xf]
    %v2600 = vld [vmem:[#allocation7 + $0x28] sm:$0xf]
    %v2601 = vld [vmem:[#allocation7 + $0x2c] sm:$0xf]
    %v2602 = vld [vmem:[#allocation7 + $0x30] sm:$0xf]
    %v2603 = vld [vmem:[#allocation7 + $0x34] sm:$0xf]
    %v2604 = vld [vmem:[#allocation7 + $0x38] sm:$0xf]
    %v2605 = vld [vmem:[#allocation7 + $0x3c] sm:$0xf]
    %v2606 = vld [vmem:[#allocation7 + $0x40] sm:$0xf]
    %v2607 = vld [vmem:[#allocation7 + $0x44] sm:$0xf]
    %v2608 = vld [vmem:[#allocation7 + $0x48] sm:$0xf]
    %v2609 = vld [vmem:[#allocation7 + $0x4c] sm:$0xf]
    %v2610 = vld [vmem:[#allocation7 + $0x50] sm:$0xf]
    %v2611 = vld [vmem:[#allocation7 + $0x54] sm:$0xf]
    %v2612 = vld [vmem:[#allocation7 + $0x58] sm:$0xf]
    %v2613 = vld [vmem:[#allocation7 + $0x5c] sm:$0xf]
    %v2614 = vld [vmem:[#allocation7 + $0x60] sm:$0xf]
    %v2615 = vld [vmem:[#allocation7 + $0x64] sm:$0xf]
    %v2616 = vld [vmem:[#allocation7 + $0x68] sm:$0xf]
    %v2617 = vld [vmem:[#allocation7 + $0x6c] sm:$0xf]
    %v2618 = vld [vmem:[#allocation7 + $0x70] sm:$0xf]
    %v2619 = vld [vmem:[#allocation7 + $0x74] sm:$0xf]
    %v2620 = vld [vmem:[#allocation7 + $0x78] sm:$0xf]
    %v2621 = vld [vmem:[#allocation7 + $0x7c] sm:$0xf]
    %v2654 = vunpack.c.l.b16 %v2590
    %v2655 = vunpack.c.l.b16 %v2591
    %v2656 = vunpack.c.l.b16 %v2592
    %v2657 = vunpack.c.l.b16 %v2593
    %v2658 = vunpack.c.l.b16 %v2594
    %v2659 = vunpack.c.l.b16 %v2595
    %v2660 = vunpack.c.l.b16 %v2596
    %v2661 = vunpack.c.l.b16 %v2597
    %v2662 = vunpack.c.l.b16 %v2598
    %v2663 = vunpack.c.l.b16 %v2599
    %v2664 = vunpack.c.l.b16 %v2600
    %v2665 = vunpack.c.l.b16 %v2601
    %v2666 = vunpack.c.l.b16 %v2602
    %v2667 = vunpack.c.l.b16 %v2603
    %v2668 = vunpack.c.l.b16 %v2604
    %v2669 = vunpack.c.l.b16 %v2605
    %v2670 = vunpack.c.l.b16 %v2606
    %v2671 = vunpack.c.l.b16 %v2607
    %v2672 = vunpack.c.l.b16 %v2608
    %v2673 = vunpack.c.l.b16 %v2609
    %v2674 = vunpack.c.l.b16 %v2610
    %v2675 = vunpack.c.l.b16 %v2611
    %v2676 = vunpack.c.l.b16 %v2612
    %v2677 = vunpack.c.l.b16 %v2613
    %v2678 = vunpack.c.l.b16 %v2614
    %v2679 = vunpack.c.l.b16 %v2615
    %v2680 = vunpack.c.l.b16 %v2616
    %v2681 = vunpack.c.l.b16 %v2617
    %v2682 = vunpack.c.l.b16 %v2618
    %v2683 = vunpack.c.l.b16 %v2619
    %v2684 = vunpack.c.l.b16 %v2620
    %v2685 = vunpack.c.l.b16 %v2621
    %v2686 = vpack.c.b16 %v2655, %v2654
    %v2687 = vpack.c.b16 %v2657, %v2656
    %v2688 = vpack.c.b16 %v2659, %v2658
    %v2689 = vpack.c.b16 %v2661, %v2660
    %v2690 = vpack.c.b16 %v2663, %v2662
    %v2691 = vpack.c.b16 %v2665, %v2664
    %v2692 = vpack.c.b16 %v2667, %v2666
    %v2693 = vpack.c.b16 %v2669, %v2668
    %v2694 = vpack.c.b16 %v2671, %v2670
    %v2695 = vpack.c.b16 %v2673, %v2672
    %v2696 = vpack.c.b16 %v2675, %v2674
    %v2697 = vpack.c.b16 %v2677, %v2676
    %v2698 = vpack.c.b16 %v2679, %v2678
    %v2699 = vpack.c.b16 %v2681, %v2680
    %v2700 = vpack.c.b16 %v2683, %v2682
    %v2701 = vpack.c.b16 %v2685, %v2684
    %2718 = vmatprep.subr.bf16.mxu0 0
    %2719 = vmatpush1.bf16.msra.mxu0 %v2693
    %2720 = vmatprep.subr.bf16.mxu0 0
    %2721 = vmatpush1.bf16.msra.mxu0 %v2692
    %2722 = vmatprep.subr.bf16.mxu0 0
    %2723 = vmatpush1.bf16.msra.mxu0 %v2691
    %2724 = vmatprep.subr.bf16.mxu0 0
    %2725 = vmatpush1.bf16.msra.mxu0 %v2690
    %2726 = vmatprep.subr.bf16.mxu0 0
    %2727 = vmatpush1.bf16.msra.mxu0 %v2689
    %2728 = vmatprep.subr.bf16.mxu0 0
    %2729 = vmatpush1.bf16.msra.mxu0 %v2688
    %2730 = vmatprep.subr.bf16.mxu0 0
    %2731 = vmatpush1.bf16.msra.mxu0 %v2687
    %2732 = vmatprep.subr.bf16.mxu0 0
    %2733 = vmatpush1.bf16.msra.mxu0 %v2686
    %2734 = vmatprep.subr.bf16.mxu0 0
    %2735 = vmatpush2.bf16.msra.mxu0 %v2701
    %2736 = vmatprep.subr.bf16.mxu0 0
    %2737 = vmatpush2.bf16.msra.mxu0 %v2700
    %2738 = vmatprep.subr.bf16.mxu0 0
    %2739 = vmatpush2.bf16.msra.mxu0 %v2699
    %2740 = vmatprep.subr.bf16.mxu0 0
    %2741 = vmatpush2.bf16.msra.mxu0 %v2698
    %2742 = vmatprep.subr.bf16.mxu0 0
    %2743 = vmatpush2.bf16.msra.mxu0 %v2697
    %2744 = vmatprep.subr.bf16.mxu0 0
    %2745 = vmatpush2.bf16.msra.mxu0 %v2696
    %2746 = vmatprep.subr.bf16.mxu0 0
    %2747 = vmatpush2.bf16.msra.mxu0 %v2695
    %2748 = vmatprep.subr.bf16.mxu0 0
    %2749 = vmatpush2.bf16.msra.mxu0 %v2694
    %2750 = vmatprep.mubr.bf16.mxu0 %v2589
    %2751 = vmatmul.mubr.bf16.gmra.mxu0 %v2588
    %v2752 = vpop.f32.mrf.mxu0
    %v2753 = vadd.f32 %v2585, %v2752
    %v2754 = vpop.f32.mrf.mxu0
    %v2755 = vpop.f32.mrf.mxu0
    %v2756 = vpop.f32.mrf.mxu0
    %2757 = vdwg.mxu0
    %v2758 = vmax.f32 %v2753, 0.0
    %v2759 = vrot.slane %v2758, 4
    %v2760 = vadd.f32 %v2758, %v2759
    %v2761 = vrot.slane %v2760, 2
    %v2762 = vadd.f32 %v2760, %v2761
    %v2763 = vrot.slane %v2762, 1
    %v2764 = vadd.f32 %v2762, %v2763
    %v2765 = vmul.f32 %v2758, %v2758
    %v2766 = vrot.slane %v2765, 4
    %v2767 = vadd.f32 %v2765, %v2766
    %v2768 = vrot.slane %v2767, 2
    %v2769 = vadd.f32 %v2767, %v2768
    %v2770 = vrot.slane %v2769, 1
    %v2771 = vadd.f32 %v2769, %v2770
    %v2772 = vmul.f32 %v2764, 0.125
    %v2773 = vmul.f32 %v2771, 0.125
    %v2774 = vmul.f32 %v2772, %v2772
    %v2775 = vsub.f32 %v2773, %v2774
    %v2776 = vmax.f32 %v2775, 0.0
    %v2777 = vadd.f32 %v2776, 1e-05
    %v2778 = vrsqrt.pop %v2777
    %v2779 = vmul.f32 %v2586, %v2778
    %v2780 = vmul.f32 %v2772, %v2779
    %v2781 = vsub.f32 %v2587, %v2780
    %v2782 = vmul.f32 %v2758, %v2779
    %v2783 = vadd.f32 %v2782, %v2781
    %v2784 = vld [vmem:[#allocation8 + $0x21] ss:$0 sm:$0xff]
    %v2785 = vpack.c.bf16 %v2783, %v2783
    %v2786 = vld [vmem:[%s4] sm:$0xf]
    %v2787 = vld [vmem:[%s4 + $0x4] sm:$0xf]
    %v2788 = vld [vmem:[%s4 + $0x8] sm:$0xf]
    %v2789 = vld [vmem:[%s4 + $0xc] sm:$0xf]
    %v2790 = vld [vmem:[%s4 + $0x10] sm:$0xf]
    %v2791 = vld [vmem:[%s4 + $0x14] sm:$0xf]
    %v2792 = vld [vmem:[%s4 + $0x18] sm:$0xf]
    %v2793 = vld [vmem:[%s4 + $0x1c] sm:$0xf]
    %v2794 = vld [vmem:[%s4 + $0x20] sm:$0xf]
    %v2795 = vld [vmem:[%s4 + $0x24] sm:$0xf]
    %v2796 = vld [vmem:[%s4 + $0x28] sm:$0xf]
    %v2797 = vld [vmem:[%s4 + $0x2c] sm:$0xf]
    %v2798 = vld [vmem:[%s4 + $0x30] sm:$0xf]
    %v2799 = vld [vmem:[%s4 + $0x34] sm:$0xf]
    %v2800 = vld [vmem:[%s4 + $0x38] sm:$0xf]
    %v2801 = vld [vmem:[%s4 + $0x3c] sm:$0xf]
    %v2818 = vunpack.c.l.b16 %v2786
    %v2819 = vunpack.c.l.b16 %v2787
    %v2820 = vunpack.c.l.b16 %v2788
    %v2821 = vunpack.c.l.b16 %v2789
    %v2822 = vunpack.c.l.b16 %v2790
    %v2823 = vunpack.c.l.b16 %v2791
    %v2824 = vunpack.c.l.b16 %v2792
    %v2825 = vunpack.c.l.b16 %v2793
    %v2826 = vunpack.c.l.b16 %v2794
    %v2827 = vunpack.c.l.b16 %v2795
    %v2828 = vunpack.c.l.b16 %v2796
    %v2829 = vunpack.c.l.b16 %v2797
    %v2830 = vunpack.c.l.b16 %v2798
    %v2831 = vunpack.c.l.b16 %v2799
    %v2832 = vunpack.c.l.b16 %v2800
    %v2833 = vunpack.c.l.b16 %v2801
    %v2834 = vpack.c.b16 %v2819, %v2818
    %v2835 = vpack.c.b16 %v2821, %v2820
    %v2836 = vpack.c.b16 %v2823, %v2822
    %v2837 = vpack.c.b16 %v2825, %v2824
    %v2838 = vpack.c.b16 %v2827, %v2826
    %v2839 = vpack.c.b16 %v2829, %v2828
    %v2840 = vpack.c.b16 %v2831, %v2830
    %v2841 = vpack.c.b16 %v2833, %v2832
    %2850 = vmatprep.subr.bf16.mxu0 0
    %2851 = vmatpush1.bf16.msra.mxu0 %v2841
    %2852 = vmatprep.subr.bf16.mxu0 0
    %2853 = vmatpush1.bf16.msra.mxu0 %v2840
    %2854 = vmatprep.subr.bf16.mxu0 0
    %2855 = vmatpush1.bf16.msra.mxu0 %v2839
    %2856 = vmatprep.subr.bf16.mxu0 0
    %2857 = vmatpush1.bf16.msra.mxu0 %v2838
    %2858 = vmatprep.subr.bf16.mxu0 0
    %2859 = vmatpush1.bf16.msra.mxu0 %v2837
    %2860 = vmatprep.subr.bf16.mxu0 0
    %2861 = vmatpush1.bf16.msra.mxu0 %v2836
    %2862 = vmatprep.subr.bf16.mxu0 0
    %2863 = vmatpush1.bf16.msra.mxu0 %v2835
    %2864 = vmatprep.subr.bf16.mxu0 0
    %2865 = vmatpush1.bf16.msra.mxu0 %v2834
    %2866 = vmatprep.subr.bf16.mxu0 0
    %2867 = vmatpush2.bf16.msra.mxu0 0
    %2868 = vmatprep.subr.bf16.mxu0 0
    %2869 = vmatpush2.bf16.msra.mxu0 0
    %2870 = vmatprep.subr.bf16.mxu0 0
    %2871 = vmatpush2.bf16.msra.mxu0 0
    %2872 = vmatprep.subr.bf16.mxu0 0
    %2873 = vmatpush2.bf16.msra.mxu0 0
    %2874 = vmatprep.subr.bf16.mxu0 0
    %2875 = vmatpush2.bf16.msra.mxu0 0
    %2876 = vmatprep.subr.bf16.mxu0 0
    %2877 = vmatpush2.bf16.msra.mxu0 0
    %2878 = vmatprep.subr.bf16.mxu0 0
    %2879 = vmatpush2.bf16.msra.mxu0 0
    %2880 = vmatprep.subr.bf16.mxu0 0
    %2881 = vmatpush2.bf16.msra.mxu0 0
    %2882 = vmatprep.mubr.bf16.mxu0 0
    %2883 = vmatmul.mubr.bf16.gmra.mxu0 %v2785
    %v2884 = vpop.f32.mrf.mxu0
    %v2885 = vadd.f32 %v2784, %v2884
    %v2886 = vpop.f32.mrf.mxu0
    %v2887 = vpop.f32.mrf.mxu0
    %v2888 = vpop.f32.mrf.mxu0
    %2889 = vdwg.mxu0
    %2890 = vst [vmem:[#allocation10] sm:$0xff] %v2885
    // Predicated region
    $region42: #{mlp_forward.1} parent=1 // pred_check
      _
    $region43: #{mlp_forward.1} parent=1 // pred_check_branch
      %2892 = sbr.rel (0) target = $region45
    $region44: #{mlp_forward.1} parent=1 // pred_region
      %s2894 = ssub.s32 128, 128
      %2895 = vsyncadd [#allocation4], %s2894
      %s2897 = sshll.u32 [#allocation10], 4
      %s2898 = int_to_ptr.vmem [resolvable:$true] %s2897
      %2900 = dma.vmem_to_hbm [thread:$0]  %s2898, 128, %s6, [#allocation4]
    $region45: #{mlp_forward.1} parent=1 // pred_fallthru
      _
    // Predicated region
    $region46: #{mlp_forward.1} parent=1 // pred_check
      _
    $region47: #{mlp_forward.1} parent=1 // pred_check_branch
      %2902 = sbr.rel (0) target = $region49
    $region48: #{mlp_forward.1} parent=1 // pred_region
      %2903 = dma.done [#allocation4], 128
    $region49: #{mlp_forward.1} parent=1 // pred_fallthru
      _
    %2904 = vsyncpa [#allocation3], 1
    %2905 = vsyncpa [#allocation6], 1
    %2906 = vsyncpa [#allocation9], 1
    %2907 = vsyncpa [#allocation4], 1

</llo_original>
